<compile_context>
chip_gen: v5e
topology: v5e:2x2
jax: 0.10.0
libtpu: 0.0.40
codegen_flags: <defaults>
</compile_context>

<pallas_src>
import math
from functools import partial

import numpy as np
import jax
import jax.numpy as jnp
from jax.experimental import pallas as pl
from jax.experimental.pallas import tpu as pltpu


# ----------------------------------------------------------------------------
# Kernel: batched multi-head cross-attention (torch.nn.MultiheadAttention
# semantics, query=(k,1,H), key=value=(L,1,H), dropout=0).  Grid axes:
# (region, key-chunk); online softmax carried in VMEM scratch.
# ----------------------------------------------------------------------------
def _aligner_mha_kernel(lens_ref,    # (R,) int32 SMEM (scalar prefetch)
                        qk_ref,      # (nh*k_pad, Hp) bf16  block-diag Q @ Wk, scaled
                        kv_ref,      # (1, tl, Hp) bf16     key chunk of region r
                        wv_ref,      # (Hp, Hp) bf16        Wv^T (zero-padded)
                        wo_ref,      # (Hp, Hp) bf16        Wo^T (zero-padded)
                        bo_ref,      # (1, Hp) f32          bo + bv @ Wo^T
                        out_ref,     # (1, k_pad, Hp) f32
                        m_sc, l_sc, acc_sc,
                        *, num_heads, k_pad, head_dim, hidden_pad, tl):
    r = pl.program_id(0)
    lc = pl.program_id(1)
    n_valid = lens_ref[r]

    @pl.when(lc == 0)
    def _init():
        m_sc[...] = jnp.full_like(m_sc, -1e30)
        l_sc[...] = jnp.zeros_like(l_sc)
        acc_sc[...] = jnp.zeros_like(acc_sc)

    chunk_start = lc * tl

    # Skip chunks that are entirely key-padding.  The host guarantees
    # n_valid >= 1, so chunk 0 always runs and m/l become finite.
    @pl.when(chunk_start < n_valid)
    def _chunk():
        kv = kv_ref[0]                                             # (tl, Hp) bf16
        # V projection: bf16 MXU pass, f32 accumulation.  bv is folded into the
        # output bias at prep time (softmax weights sum to 1); bk was dropped
        # because its score contribution is constant per row -> cancels in softmax.
        vp = jnp.dot(kv, wv_ref[...],
                     preferred_element_type=jnp.float32).astype(jnp.bfloat16)

        # All-head scores in one bf16 MXU pass (1/sqrt(hd) and Wk folded into qk).
        s = jax.lax.dot_general(
            qk_ref[...], kv, dimension_numbers=(((1,), (1,)), ((), ())),
            preferred_element_type=jnp.float32)                    # (qr, tl)

        # additive key-padding mask from the scalar-prefetched region length
        col = jax.lax.broadcasted_iota(jnp.int32, (1, tl), 1) + chunk_start
        s = s + jnp.where(col < n_valid, 0.0, -1e30)

        # online softmax (normalization deferred to the finalize step)
        m_prev = m_sc[...]
        m_new = jnp.maximum(m_prev, jnp.max(s, axis=-1, keepdims=True))
        alpha = jnp.exp(m_prev - m_new)
        p = jnp.exp(s - m_new)
        l_sc[...] = alpha * l_sc[...] + jnp.sum(p, axis=-1, keepdims=True)
        acc_sc[...] = alpha * acc_sc[...] + jnp.dot(
            p.astype(jnp.bfloat16), vp, preferred_element_type=jnp.float32)
        m_sc[...] = m_new

    @pl.when(lc == pl.num_programs(1) - 1)
    def _finalize():
        denom = l_sc[...]
        # guard against a (host-excluded) fully masked region -> no inf/NaN
        inv = pl.reciprocal(jnp.where(denom > 0.0, denom, 1.0), approx=True)
        ctx = acc_sc[...] * inv                                    # (qr, Hp)

        # keep only each head block's own value columns, then fold the head
        # blocks back into concat-of-heads layout (in-kernel mask, no sel input)
        ctx3 = ctx.reshape(num_heads, k_pad, hidden_pad)
        head_idx = jax.lax.broadcasted_iota(
            jnp.int32, (num_heads, k_pad, hidden_pad), 0)
        col_idx = jax.lax.broadcasted_iota(
            jnp.int32, (num_heads, k_pad, hidden_pad), 2)
        own = (col_idx >= head_idx * head_dim) & (col_idx < (head_idx + 1) * head_dim)
        concat = jnp.sum(jnp.where(own, ctx3, 0.0), axis=0)        # (k_pad, Hp)

        out = jnp.dot(concat.astype(jnp.bfloat16), wo_ref[...],
                      preferred_element_type=jnp.float32) + bo_ref[...]
        out_ref[0] = out.astype(out_ref.dtype)


# ----------------------------------------------------------------------------
# Wrapper: one pallas_call for all regions.
# ----------------------------------------------------------------------------
def _vmem_limit_bytes():
    cap = 128 * 1024 * 1024
    try:
        cap = int(getattr(pltpu.get_tpu_info(), "vmem_capacity_bytes", cap))
    except Exception:
        pass
    # ~96 MiB on v5e/v6e (128 MiB VMEM), ~48 MiB on v7x (64 MiB VMEM)
    return min((cap * 3) // 4, 100 * 1024 * 1024)


def _choose_key_chunk(max_l, hidden_pad):
    target = 512 if hidden_pad <= 1024 else 256
    if max_l <= target:
        tl = max(128, -(-max_l // 128) * 128)
    else:
        tl = target
    l_max = -(-max_l // tl) * tl
    return tl, l_max


def batched_cross_attention(prep, kv_slab, lens, *, tl):
    """kv_slab: (R, l_max, Hp) bf16 zero-padded regions; lens: (R,) int32 valid
    key counts.  Returns (R, k, H) f32 aligned regions."""
    R, l_max, Hp = kv_slab.shape
    assert Hp == prep["hidden_pad"] and l_max % tl == 0
    k_pad, nh, hd = prep["k_pad"], prep["num_heads"], prep["head_dim"]
    qr = nh * k_pad
    n_lc = l_max // tl

    kernel = partial(_aligner_mha_kernel, num_heads=nh, k_pad=k_pad,
                     head_dim=hd, hidden_pad=Hp, tl=tl)

    const = lambda r, l, lens_ref: (0, 0)          # VMEM-resident across the grid
    grid_spec = pltpu.PrefetchScalarGridSpec(
        num_scalar_prefetch=1,
        grid=(R, n_lc),
        in_specs=[
            # TODO(synk): mark these constant operands pipeline_mode=pl.Buffered(1)
            # once single-buffering of resident inputs is verified on the target
            # jax version (frees one duplicate copy of each weight in VMEM).
            pl.BlockSpec((qr, Hp), const),                                  # qk
            pl.BlockSpec((1, tl, Hp), lambda r, l, lens_ref: (r, l, 0)),    # kv chunk
            pl.BlockSpec((Hp, Hp), const),                                  # wv_t
            pl.BlockSpec((Hp, Hp), const),                                  # wo_t
            pl.BlockSpec((1, Hp), const),                                   # bo_eff
        ],
        out_specs=pl.BlockSpec((1, k_pad, Hp), lambda r, l, lens_ref: (r, 0, 0)),
        scratch_shapes=[pltpu.VMEM((qr, 1), jnp.float32),    # running max
                        pltpu.VMEM((qr, 1), jnp.float32),    # running denom
                        pltpu.VMEM((qr, Hp), jnp.float32)],  # unnormalized ctx
    )

    flops = (R * n_lc * (2 * tl * Hp * Hp + 4 * qr * Hp * tl)
             + R * 2 * k_pad * Hp * Hp)
    cost = pl.CostEstimate(
        flops=int(flops),
        transcendentals=int(R * (n_lc * (qr * tl + qr) + qr)),
        bytes_accessed=int(R * l_max * Hp * 2 + R * k_pad * Hp * 4
                           + qr * Hp * 2 + 2 * Hp * Hp * 2 + Hp * 4))

    out = pl.pallas_call(
        kernel,
        out_shape=jax.ShapeDtypeStruct((R, k_pad, Hp), jnp.float32),
        grid_spec=grid_spec,
        compiler_params=pltpu.CompilerParams(
            # regions shard across v7x's 2 TensorCores; key-chunk axis is a
            # reduction carried in scratch -> "arbitrary"
            dimension_semantics=("parallel", "arbitrary"),
            vmem_limit_bytes=_vmem_limit_bytes()),
        cost_estimate=cost,
    )(lens, prep["qk"], kv_slab, prep["wv_t"], prep["wo_t"], prep["bo_eff"])
    return out[:, :prep["k"], :prep["hidden"]]


# ----------------------------------------------------------------------------
# One-time parameter preprocessing (hoisted out of the per-call path).
# ----------------------------------------------------------------------------
def prepare_params(params, *, k, num_heads):
    it = np.asarray(params["implicit_tokens"], np.float32)        # (k, H)
    H = it.shape[1]
    assert H % num_heads == 0
    hd = H // num_heads

    w_in = np.asarray(params["in_proj_weight"], np.float32)       # (3H, H)
    b_in = np.asarray(params["in_proj_bias"], np.float32)         # (3H,)
    wq, wk, wv = w_in[:H], w_in[H:2 * H], w_in[2 * H:]
    bq, bk, bv = b_in[:H], b_in[H:2 * H], b_in[2 * H:]
    wo = np.asarray(params["out_proj_weight"], np.float32)        # (H, H)
    bo = np.asarray(params["out_proj_bias"], np.float32)          # (H,)

    # Q projection is input independent -> done once; fold the 1/sqrt(hd) scale.
    q_proj = (it @ wq.T + bq) * (1.0 / math.sqrt(hd))             # (k, H)

    k_pad = max(8, -(-k // 8) * 8)                                # >= 8 sublanes
    qr = num_heads * k_pad

    # Block-diagonal Q over heads: head h's queries live in sublane block
    # [h*k_pad, (h+1)*k_pad) and only their own hd columns are nonzero.
    qb = np.zeros((qr, H), np.float32)
    for h in range(num_heads):
        qb[h * k_pad:h * k_pad + k, h * hd:(h + 1) * hd] = \
            q_proj[:, h * hd:(h + 1) * hd]
    chk = qb.copy()
    for h in range(num_heads):
        chk[h * k_pad:(h + 1) * k_pad, h * hd:(h + 1) * hd] = 0.0
    assert not chk.any(), "block-diagonal Q layout drifted"

    # Fold Wk into the precomputed queries: s = (qb @ Wk) @ kv^T.  bk is dropped
    # on purpose: q.bk is constant along the key axis and cancels in softmax.
    qk = qb @ wk                                                   # (qr, H)

    # Fold bv through the output projection: softmax weights sum to 1, so +bv on
    # every value row adds exactly bv to each concat-of-heads row -> bv @ Wo^T.
    bo_eff = bo + bv @ wo.T                                        # (H,)

    # Pad the hidden axis to a lane-dense multiple of 128 (zero weight rows/cols
    # keep the math exact; the wrapper slices the pad away).
    Hp = max(128, -(-H // 128) * 128)

    def _pad_h(a, axes):
        pads = [(0, 0)] * a.ndim
        for ax in axes:
            pads[ax] = (0, Hp - H)
        return np.pad(a, pads)

    return dict(
        qk=jnp.asarray(_pad_h(qk, [1]), jnp.bfloat16),                  # (qr, Hp)
        wv_t=jnp.asarray(_pad_h(wv.T, [0, 1]), jnp.bfloat16),           # (Hp, Hp)
        wo_t=jnp.asarray(_pad_h(wo.T, [0, 1]), jnp.bfloat16),           # (Hp, Hp)
        bo_eff=jnp.asarray(_pad_h(bo_eff.reshape(1, H), [1]), jnp.float32),
        k=k, k_pad=k_pad, num_heads=num_heads, head_dim=hd,
        hidden=H, hidden_pad=Hp)


# ----------------------------------------------------------------------------
# Host-side glue mirroring the PyTorch forward (search / splice / re-pad).
# ----------------------------------------------------------------------------
def _build_plans(ids_np, think_id, end_id):
    plans, regions = [], []
    for i in range(ids_np.shape[0]):
        ids = ids_np[i]
        tpos = np.nonzero(ids == think_id)[0]
        epos = np.nonzero(ids == end_id)[0]
        if len(tpos) == 0 or len(epos) == 0:
            plans.append(("copy",)); continue
        # TODO(synk): reference indexes think_positions[2] unconditionally and would
        # raise IndexError for <3 occurrences; we fall through to the copy path.
        if len(tpos) < 3:
            plans.append(("copy",)); continue
        start = int(tpos[2])
        cand = epos[epos > start]
        if len(cand) == 0:
            plans.append(("copy",)); continue
        end = int(cand[-1])
        if end - (start + 1) <= 0:
            plans.append(("drop", start, end)); continue
        plans.append(("attend", start, end, len(regions)))
        regions.append((i, start, end))
    return plans, regions


def implicit_tokens_aligner_forward(embeddings, input_ids, attention_mask,
                                    tokenizer, pad_token_emb, prep):
    emb_np = np.asarray(embeddings)
    ids_np = np.asarray(input_ids)
    mask_np = np.asarray(attention_mask)
    pad_np = np.asarray(pad_token_emb)
    B, S, H = emb_np.shape
    assert H == prep["hidden"]
    k, Hp = prep["k"], prep["hidden_pad"]

    think_id = tokenizer.convert_tokens_to_ids('<think>')
    end_id = tokenizer.convert_tokens_to_ids('</think>')
    plans, regions = _build_plans(ids_np, think_id, end_id)

    aligned_np = None
    if regions:
        max_l = max(e - (s + 1) for (_, s, e) in regions)
        tl, l_max = _choose_key_chunk(max_l, Hp)
        R = len(regions)
        # build the padded KV slab directly in bf16 on the host (halves H2D
        # bytes and removes the on-device cast pass)
        slab = np.zeros((R, l_max, Hp), dtype=jnp.bfloat16)
        lens = np.zeros((R,), np.int32)
        for j, (i, s, e) in enumerate(regions):
            reg = emb_np[i, s + 1:e]
            slab[j, :reg.shape[0], :H] = reg.astype(jnp.bfloat16)
            lens[j] = reg.shape[0]
        aligned = batched_cross_attention(prep, jnp.asarray(slab),
                                          jnp.asarray(lens), tl=tl)
        aligned_np = np.asarray(aligned).astype(emb_np.dtype)

    new_embs, new_masks = [], []
    for i, plan in enumerate(plans):
        emb, mask = emb_np[i], mask_np[i]
        if plan[0] == "copy":
            new_embs.append(emb); new_masks.append(mask)
        elif plan[0] == "drop":
            s, e = plan[1], plan[2]
            new_embs.append(np.concatenate([emb[:s], emb[e + 1:]], axis=0))
            new_masks.append(np.concatenate([mask[:s], mask[e + 1:]], axis=0))
        else:
            s, e, j = plan[1], plan[2], plan[3]
            new_embs.append(np.concatenate([emb[:s], aligned_np[j], emb[e + 1:]], axis=0))
            new_masks.append(np.concatenate(
                [mask[:s], np.ones((k,), dtype=mask.dtype), mask[e + 1:]], axis=0))

    max_len = max(e.shape[0] for e in new_embs)
    out_emb = np.empty((B, max_len, H), emb_np.dtype)
    out_mask = np.zeros((B, max_len), mask_np.dtype)
    for i, (e, m) in enumerate(zip(new_embs, new_masks)):
        n = e.shape[0]
        out_emb[i, :n] = e
        out_emb[i, n:] = pad_np[None, :]
        out_mask[i, :n] = m
    return jnp.asarray(out_emb), jnp.asarray(out_mask)


# ----------------------------------------------------------------------------
# Exact f32 host reference (documents the bf16 / approx-reciprocal tolerance).
# ----------------------------------------------------------------------------
def _mha_np(query_tokens, region, params, num_heads):
    H = region.shape[1]
    hd = H // num_heads
    w_in = np.asarray(params["in_proj_weight"], np.float32)
    b_in = np.asarray(params["in_proj_bias"], np.float32)
    wq, wk, wv = w_in[:H], w_in[H:2 * H], w_in[2 * H:]
    bq, bk, bv = b_in[:H], b_in[H:2 * H], b_in[2 * H:]
    q = query_tokens @ wq.T + bq
    kk = region @ wk.T + bk
    vv = region @ wv.T + bv
    concat = np.zeros((q.shape[0], H), np.float32)
    for h in range(num_heads):
        sl = slice(h * hd, (h + 1) * hd)
        s = (q[:, sl] / math.sqrt(hd)) @ kk[:, sl].T
        s = s - s.max(axis=-1, keepdims=True)
        p = np.exp(s); p = p / p.sum(axis=-1, keepdims=True)
        concat[:, sl] = p @ vv[:, sl]
    wo = np.asarray(params["out_proj_weight"], np.float32)
    bo = np.asarray(params["out_proj_bias"], np.float32)
    return concat @ wo.T + bo


def _reference_forward_np(params, embeddings, input_ids, attention_mask,
                          tokenizer, pad_token_emb, *, k, num_heads):
    emb_np = np.asarray(embeddings, np.float32)
    ids_np = np.asarray(input_ids)
    mask_np = np.asarray(attention_mask)
    pad_np = np.asarray(pad_token_emb, np.float32)
    it = np.asarray(params["implicit_tokens"], np.float32)
    plans, _ = _build_plans(ids_np, tokenizer.convert_tokens_to_ids('<think>'),
                            tokenizer.convert_tokens_to_ids('</think>'))
    new_embs, new_masks = [], []
    for i, plan in enumerate(plans):
        emb, mask = emb_np[i], mask_np[i]
        if plan[0] == "copy":
            new_embs.append(emb); new_masks.append(mask)
        elif plan[0] == "drop":
            s, e = plan[1], plan[2]
            new_embs.append(np.concatenate([emb[:s], emb[e + 1:]], 0))
            new_masks.append(np.concatenate([mask[:s], mask[e + 1:]], 0))
        else:
            s, e = plan[1], plan[2]
            aligned = _mha_np(it, emb[s + 1:e], params, num_heads)
            new_embs.append(np.concatenate([emb[:s], aligned, emb[e + 1:]], 0))
            new_masks.append(np.concatenate(
                [mask[:s], np.ones((k,), mask.dtype), mask[e + 1:]], 0))
    max_len = max(e.shape[0] for e in new_embs)
    B, H = emb_np.shape[0], emb_np.shape[2]
    out_emb = np.empty((B, max_len, H), np.float32)
    out_mask = np.zeros((B, max_len), mask_np.dtype)
    for i, (e, m) in enumerate(zip(new_embs, new_masks)):
        n = e.shape[0]
        out_emb[i, :n] = e
        out_emb[i, n:] = pad_np[None, :]
        out_mask[i, :n] = m
    return out_emb, out_mask


# ----------------------------------------------------------------------------
# Deterministic parameter init (shapes from the module __init__).
# ----------------------------------------------------------------------------
def init_params(key, hidden_size, k):
    k1, k2, k3, k4, k5 = jax.random.split(key, 5)
    s = 1.0 / math.sqrt(hidden_size)
    return dict(
        implicit_tokens=jax.random.normal(k1, (k, hidden_size), jnp.float32),
        in_proj_weight=jax.random.normal(k2, (3 * hidden_size, hidden_size), jnp.float32) * s,
        in_proj_bias=jax.random.normal(k3, (3 * hidden_size,), jnp.float32) * 0.01,
        out_proj_weight=jax.random.normal(k4, (hidden_size, hidden_size), jnp.float32) * s,
        out_proj_bias=jax.random.normal(k5, (hidden_size,), jnp.float32) * 0.01,
    )


class DummyTokenizer:
    _vocab = {'<think>': 5, '</think>': 6}

    def convert_tokens_to_ids(self, tok):
        return self._vocab[tok]


if __name__ == "__main__":
    B, S, H, K, NH = 3, 16, 64, 4, 8
    key = jax.random.PRNGKey(0)
    kparam, kemb, kpad = jax.random.split(key, 3)

    params = init_params(kparam, H, K)
    prep = prepare_params(params, k=K, num_heads=NH)

    embeddings = jax.random.normal(kemb, (B, S, H), jnp.float32)
    attention_mask = jnp.ones((B, S), dtype=jnp.int32)
    pad_token_emb = jax.random.normal(kpad, (H,), jnp.float32)

    # item 0: three <think> (5) and two </think> (6) -> region length 6
    # item 1: no think tokens -> passthrough
    # item 2: three <think>, one </think>            -> region length 3
    input_ids = jnp.array([
        [1, 5, 2, 5, 3, 5, 7, 8, 9, 10, 6, 11, 6, 12, 13, 14],
        [1, 2, 3, 4, 7, 8, 9, 10, 11, 12, 13, 14, 15, 16, 17, 18],
        [5, 2, 5, 3, 5, 7, 8, 9, 6, 10, 11, 12, 13, 14, 15, 16],
    ], dtype=jnp.int32)

    tokenizer = DummyTokenizer()
    new_emb, new_mask = implicit_tokens_aligner_forward(
        embeddings, input_ids, attention_mask, tokenizer, pad_token_emb, prep)
    jax.block_until_ready(new_emb)
    jax.block_until_ready(new_mask)

    # exact-f32 reference; loose tolerance covers bf16 operands + approx reciprocal
    ref_emb, ref_mask = _reference_forward_np(
        params, embeddings, input_ids, attention_mask, tokenizer,
        pad_token_emb, k=K, num_heads=NH)
    assert new_emb.shape == ref_emb.shape and new_mask.shape == ref_mask.shape
    np.testing.assert_array_equal(np.asarray(new_mask), ref_mask)
    np.testing.assert_allclose(np.asarray(new_emb), ref_emb, rtol=0.1, atol=0.1)
    assert bool(jnp.isfinite(new_emb).all())
    print("KERNEL_OK")
</pallas_src>

<mosaic_0001>
module attributes {stable_mosaic.version = 11 : i64} {
  func.func @_aligner_mha_kernel(%arg0: i32, %arg1: i32, %arg2: memref<2xi32, #tpu.memory_space<smem>>, %arg3: memref<64x128xbf16, #tpu.memory_space<vmem>>, %arg4: memref<1x128x128xbf16, #tpu.memory_space<vmem>>, %arg5: memref<128x128xbf16, #tpu.memory_space<vmem>>, %arg6: memref<128x128xbf16, #tpu.memory_space<vmem>>, %arg7: memref<1x128xf32, #tpu.memory_space<vmem>>, %arg8: memref<1x8x128xf32, #tpu.memory_space<vmem>>, %arg9: memref<64x1xf32, #tpu.memory_space<vmem>>, %arg10: memref<64x1xf32, #tpu.memory_space<vmem>>, %arg11: memref<64x128xf32, #tpu.memory_space<vmem>>) attributes {dimension_semantics = [#tpu.dimension_semantics<parallel>, #tpu.dimension_semantics<arbitrary>], iteration_bounds = array<i64: 2, 1>, scalar_prefetch = 1 : i64, scratch_operands = 3 : i64, tpu.core_type = #tpu.core_type<tc>, window_params = [{pipeline_mode = #tpu.pipeline_mode<synchronous>, transform_indices = @transform_0, window_bounds = array<i64: 64, 128>}, {transform_indices = @transform_1, window_bounds = array<i64: 1, 128, 128>}, {pipeline_mode = #tpu.pipeline_mode<synchronous>, transform_indices = @transform_2, window_bounds = array<i64: 128, 128>}, {pipeline_mode = #tpu.pipeline_mode<synchronous>, transform_indices = @transform_3, window_bounds = array<i64: 128, 128>}, {pipeline_mode = #tpu.pipeline_mode<synchronous>, transform_indices = @transform_4, window_bounds = array<i64: 1, 128>}, {transform_indices = @transform_5, window_bounds = array<i64: 1, 8, 128>}]} {
    %0 = arith.index_cast %arg0 : i32 to index
    %1 = memref.load %arg2[%0] : memref<2xi32, #tpu.memory_space<smem>>
    %c0_i32 = arith.constant 0 : i32
    %2 = arith.cmpi eq, %arg1, %c0_i32 : i32
    %3 = arith.extui %2 : i1 to i32
    %c0_i32_0 = arith.constant 0 : i32
    %4 = arith.cmpi ne, %3, %c0_i32_0 : i32
    scf.if %4 {
      %cst = arith.constant -1.000000e+30 : f32
      %12 = vector.broadcast %cst : f32 to vector<64x1xf32>
      %c0 = arith.constant 0 : index
      %c0_4 = arith.constant 0 : index
      %13 = vector.load %arg9[%c0, %c0_4] : memref<64x1xf32, #tpu.memory_space<vmem>>, vector<64x1xf32>
      tpu.vector_store %arg9[%c0, %c0_4], %12 {strides = array<i32>} : memref<64x1xf32, #tpu.memory_space<vmem>>, vector<64x1xf32>,
      %cst_5 = arith.constant 0.000000e+00 : f32
      %14 = vector.broadcast %cst_5 : f32 to vector<64x1xf32>
      %c0_6 = arith.constant 0 : index
      %c0_7 = arith.constant 0 : index
      %15 = vector.load %arg10[%c0_6, %c0_7] : memref<64x1xf32, #tpu.memory_space<vmem>>, vector<64x1xf32>
      tpu.vector_store %arg10[%c0_6, %c0_7], %14 {strides = array<i32>} : memref<64x1xf32, #tpu.memory_space<vmem>>, vector<64x1xf32>,
      %cst_8 = arith.constant 0.000000e+00 : f32
      %16 = vector.broadcast %cst_8 : f32 to vector<64x128xf32>
      %c0_9 = arith.constant 0 : index
      %c0_10 = arith.constant 0 : index
      %17 = vector.load %arg11[%c0_9, %c0_10] : memref<64x128xf32, #tpu.memory_space<vmem>>, vector<64x128xf32>
      tpu.vector_store %arg11[%c0_9, %c0_10], %16 {strides = array<i32>} : memref<64x128xf32, #tpu.memory_space<vmem>>, vector<64x128xf32>,
    } else {
    }
    %c128_i32 = arith.constant 128 : i32
    %5 = arith.muli %arg1, %c128_i32 : i32
    %6 = arith.cmpi slt, %5, %1 : i32
    %7 = arith.extui %6 : i1 to i32
    %c0_i32_1 = arith.constant 0 : i32
    %8 = arith.cmpi ne, %7, %c0_i32_1 : i32
    scf.if %8 {
      %c0 = arith.constant 0 : index
      %c0_4 = arith.constant 0 : index
      %c0_5 = arith.constant 0 : index
      %12 = vector.load %arg4[%c0, %c0_4, %c0_5] : memref<1x128x128xbf16, #tpu.memory_space<vmem>>, vector<1x128x128xbf16>
      %13 = vector.shape_cast %12 : vector<1x128x128xbf16> to vector<128x128xbf16>
      %c0_6 = arith.constant 0 : index
      %c0_7 = arith.constant 0 : index
      %14 = vector.load %arg5[%c0_6, %c0_7] : memref<128x128xbf16, #tpu.memory_space<vmem>>, vector<128x128xbf16>
      %cst = arith.constant dense<0.000000e+00> : vector<128x128xf32>
      %15 = tpu.matmul %13, %14, %cst {dimension_numbers = #tpu.dot_dimension_numbers<[1], [0], [0], [1], [0, 0, 1, 1], [], []>} : vector<128x128xbf16>, vector<128x128xbf16>, vector<128x128xf32> -> vector<128x128xf32>
      %16 = arith.truncf %15 : vector<128x128xf32> to vector<128x128xbf16>
      %c0_8 = arith.constant 0 : index
      %c0_9 = arith.constant 0 : index
      %17 = vector.load %arg3[%c0_8, %c0_9] : memref<64x128xbf16, #tpu.memory_space<vmem>>, vector<64x128xbf16>
      %cst_10 = arith.constant dense<0.000000e+00> : vector<64x128xf32>
      %18 = tpu.matmul %17, %13, %cst_10 {dimension_numbers = #tpu.dot_dimension_numbers<[1], [1], [0], [0], [0, 0, 1, 0], [], []>} : vector<64x128xbf16>, vector<128x128xbf16>, vector<64x128xf32> -> vector<64x128xf32>
      %19 = tpu.iota {dimensions = array<i32: 1>} : vector<1x128xi32>
      %20 = vector.broadcast %5 : i32 to vector<1x128xi32>
      %21 = arith.addi %19, %20 : vector<1x128xi32>
      %22 = vector.broadcast %1 : i32 to vector<1x128xi32>
      %23 = arith.cmpi slt, %21, %22 : vector<1x128xi32>
      %cst_11 = arith.constant 0.000000e+00 : f32
      %cst_12 = arith.constant -1.000000e+30 : f32
      %24 = vector.broadcast %cst_11 : f32 to vector<1x128xf32>
      %25 = vector.broadcast %cst_12 : f32 to vector<1x128xf32>
      %26 = arith.select %23, %24, %25 : vector<1x128xi1>, vector<1x128xf32>
      %27 = vector.broadcast %26 : vector<1x128xf32> to vector<64x128xf32>
      %28 = arith.addf %18, %27 : vector<64x128xf32>
      %c0_13 = arith.constant 0 : index
      %c0_14 = arith.constant 0 : index
      %29 = vector.load %arg9[%c0_13, %c0_14] : memref<64x1xf32, #tpu.memory_space<vmem>>, vector<64x1xf32>
      %cst_15 = arith.constant dense<0xFF800000> : vector<64xf32>
      %30 = vector.multi_reduction <maximumf>, %28, %cst_15 [1] : vector<64x128xf32> to vector<64xf32>
      %31 = vector.shape_cast %30 : vector<64xf32> to vector<64x1xf32>
      %32 = arith.maximumf %29, %31 : vector<64x1xf32>
      %33 = arith.subf %29, %32 : vector<64x1xf32>
      %34 = math.exp %33 : vector<64x1xf32>
      %35 = vector.broadcast %32 : vector<64x1xf32> to vector<64x128xf32>
      %36 = arith.subf %28, %35 : vector<64x128xf32>
      %37 = math.exp %36 : vector<64x128xf32>
      %c0_16 = arith.constant 0 : index
      %c0_17 = arith.constant 0 : index
      %38 = vector.load %arg10[%c0_16, %c0_17] : memref<64x1xf32, #tpu.memory_space<vmem>>, vector<64x1xf32>
      %39 = arith.mulf %34, %38 : vector<64x1xf32>
      %cst_18 = arith.constant dense<0.000000e+00> : vector<64xf32>
      %40 = vector.multi_reduction <add>, %37, %cst_18 [1] : vector<64x128xf32> to vector<64xf32>
      %41 = vector.shape_cast %40 : vector<64xf32> to vector<64x1xf32>
      %42 = arith.addf %39, %41 : vector<64x1xf32>
      %c0_19 = arith.constant 0 : index
      %c0_20 = arith.constant 0 : index
      %43 = vector.load %arg10[%c0_19, %c0_20] : memref<64x1xf32, #tpu.memory_space<vmem>>, vector<64x1xf32>
      tpu.vector_store %arg10[%c0_19, %c0_20], %42 {strides = array<i32>} : memref<64x1xf32, #tpu.memory_space<vmem>>, vector<64x1xf32>,
      %c0_21 = arith.constant 0 : index
      %c0_22 = arith.constant 0 : index
      %44 = vector.load %arg11[%c0_21, %c0_22] : memref<64x128xf32, #tpu.memory_space<vmem>>, vector<64x128xf32>
      %45 = vector.broadcast %34 : vector<64x1xf32> to vector<64x128xf32>
      %46 = arith.mulf %45, %44 : vector<64x128xf32>
      %47 = arith.truncf %37 : vector<64x128xf32> to vector<64x128xbf16>
      %cst_23 = arith.constant dense<0.000000e+00> : vector<64x128xf32>
      %48 = tpu.matmul %47, %16, %cst_23 {dimension_numbers = #tpu.dot_dimension_numbers<[1], [0], [0], [1], [0, 0, 1, 1], [], []>} : vector<64x128xbf16>, vector<128x128xbf16>, vector<64x128xf32> -> vector<64x128xf32>
      %49 = arith.addf %46, %48 : vector<64x128xf32>
      %c0_24 = arith.constant 0 : index
      %c0_25 = arith.constant 0 : index
      %50 = vector.load %arg11[%c0_24, %c0_25] : memref<64x128xf32, #tpu.memory_space<vmem>>, vector<64x128xf32>
      tpu.vector_store %arg11[%c0_24, %c0_25], %49 {strides = array<i32>} : memref<64x128xf32, #tpu.memory_space<vmem>>, vector<64x128xf32>,
      %c0_26 = arith.constant 0 : index
      %c0_27 = arith.constant 0 : index
      %51 = vector.load %arg9[%c0_26, %c0_27] : memref<64x1xf32, #tpu.memory_space<vmem>>, vector<64x1xf32>
      tpu.vector_store %arg9[%c0_26, %c0_27], %32 {strides = array<i32>} : memref<64x1xf32, #tpu.memory_space<vmem>>, vector<64x1xf32>,
    } else {
    }
    %c0_i32_2 = arith.constant 0 : i32
    %9 = arith.cmpi eq, %arg1, %c0_i32_2 : i32
    %10 = arith.extui %9 : i1 to i32
    %c0_i32_3 = arith.constant 0 : i32
    %11 = arith.cmpi ne, %10, %c0_i32_3 : i32
    scf.if %11 {
      %c0 = arith.constant 0 : index
      %c0_4 = arith.constant 0 : index
      %12 = vector.load %arg10[%c0, %c0_4] : memref<64x1xf32, #tpu.memory_space<vmem>>, vector<64x1xf32>
      %cst = arith.constant 0.000000e+00 : f32
      %13 = vector.broadcast %cst : f32 to vector<64x1xf32>
      %14 = arith.cmpf ogt, %12, %13 : vector<64x1xf32>
      %cst_5 = arith.constant 1.000000e+00 : f32
      %15 = vector.broadcast %cst_5 : f32 to vector<64x1xf32>
      %16 = arith.select %14, %12, %15 : vector<64x1xi1>, vector<64x1xf32>
      %17 = tpu.reciprocal %16 {approx = true} : vector<64x1xf32> -> vector<64x1xf32>
      %c0_6 = arith.constant 0 : index
      %c0_7 = arith.constant 0 : index
      %18 = vector.load %arg11[%c0_6, %c0_7] : memref<64x128xf32, #tpu.memory_space<vmem>>, vector<64x128xf32>
      %19 = vector.broadcast %17 : vector<64x1xf32> to vector<64x128xf32>
      %20 = arith.mulf %18, %19 : vector<64x128xf32>
      %21 = vector.shape_cast %20 : vector<64x128xf32> to vector<8x8x128xf32>
      %22 = tpu.iota {dimensions = array<i32: 0>} : vector<8x8x128xi32>
      %23 = tpu.iota {dimensions = array<i32: 2>} : vector<8x8x128xi32>
      %c8_i32 = arith.constant 8 : i32
      %24 = vector.broadcast %c8_i32 : i32 to vector<8x8x128xi32>
      %25 = arith.muli %22, %24 : vector<8x8x128xi32>
      %26 = arith.cmpi sge, %23, %25 : vector<8x8x128xi32>
      %c1_i32 = arith.constant 1 : i32
      %27 = vector.broadcast %c1_i32 : i32 to vector<8x8x128xi32>
      %28 = arith.addi %22, %27 : vector<8x8x128xi32>
      %c8_i32_8 = arith.constant 8 : i32
      %29 = vector.broadcast %c8_i32_8 : i32 to vector<8x8x128xi32>
      %30 = arith.muli %28, %29 : vector<8x8x128xi32>
      %31 = arith.cmpi slt, %23, %30 : vector<8x8x128xi32>
      %32 = arith.andi %26, %31 : vector<8x8x128xi1>
      %cst_9 = arith.constant 0.000000e+00 : f32
      %33 = vector.broadcast %cst_9 : f32 to vector<8x8x128xf32>
      %34 = arith.select %32, %21, %33 : vector<8x8x128xi1>, vector<8x8x128xf32>
      %cst_10 = arith.constant dense<0.000000e+00> : vector<8x128xf32>
      %35 = vector.multi_reduction <add>, %34, %cst_10 [0] : vector<8x8x128xf32> to vector<8x128xf32>
      %36 = arith.truncf %35 : vector<8x128xf32> to vector<8x128xbf16>
      %c0_11 = arith.constant 0 : index
      %c0_12 = arith.constant 0 : index
      %37 = vector.load %arg6[%c0_11, %c0_12] : memref<128x128xbf16, #tpu.memory_space<vmem>>, vector<128x128xbf16>
      %cst_13 = arith.constant dense<0.000000e+00> : vector<8x128xf32>
      %38 = tpu.matmul %36, %37, %cst_13 {dimension_numbers = #tpu.dot_dimension_numbers<[1], [0], [0], [1], [0, 0, 1, 1], [], []>} : vector<8x128xbf16>, vector<128x128xbf16>, vector<8x128xf32> -> vector<8x128xf32>
      %c0_14 = arith.constant 0 : index
      %c0_15 = arith.constant 0 : index
      %39 = vector.load %arg7[%c0_14, %c0_15] : memref<1x128xf32, #tpu.memory_space<vmem>>, vector<1x128xf32>
      %40 = vector.broadcast %39 : vector<1x128xf32> to vector<8x128xf32>
      %41 = arith.addf %38, %40 : vector<8x128xf32>
      %c0_16 = arith.constant 0 : index
      %c0_17 = arith.constant 0 : index
      %c0_18 = arith.constant 0 : index
      %42 = vector.load %arg8[%c0_16, %c0_17, %c0_18] : memref<1x8x128xf32, #tpu.memory_space<vmem>>, vector<1x8x128xf32>
      %43 = vector.shape_cast %42 : vector<1x8x128xf32> to vector<8x128xf32>
      %44 = vector.shape_cast %41 : vector<8x128xf32> to vector<1x8x128xf32>
      tpu.vector_store %arg8[%c0_16, %c0_17, %c0_18], %44 {strides = array<i32>} : memref<1x8x128xf32, #tpu.memory_space<vmem>>, vector<1x8x128xf32>,
    } else {
    }
    return
  }
  func.func @transform_0(%arg0: i32, %arg1: i32, %arg2: memref<2xi32, #tpu.memory_space<smem>>) -> (i32, i32) {
    %c0_i32 = arith.constant 0 : i32
    %c0_i32_0 = arith.constant 0 : i32
    %c0_i32_1 = arith.constant 0 : i32
    return %c0_i32, %c0_i32_0 : i32, i32
  }
  func.func @transform_1(%arg0: i32, %arg1: i32, %arg2: memref<2xi32, #tpu.memory_space<smem>>) -> (i32, i32, i32) {
    %c0_i32 = arith.constant 0 : i32
    %c0_i32_0 = arith.constant 0 : i32
    return %arg0, %arg1, %c0_i32 : i32, i32, i32
  }
  func.func @transform_2(%arg0: i32, %arg1: i32, %arg2: memref<2xi32, #tpu.memory_space<smem>>) -> (i32, i32) {
    %c0_i32 = arith.constant 0 : i32
    %c0_i32_0 = arith.constant 0 : i32
    %c0_i32_1 = arith.constant 0 : i32
    return %c0_i32, %c0_i32_0 : i32, i32
  }
  func.func @transform_3(%arg0: i32, %arg1: i32, %arg2: memref<2xi32, #tpu.memory_space<smem>>) -> (i32, i32) {
    %c0_i32 = arith.constant 0 : i32
    %c0_i32_0 = arith.constant 0 : i32
    %c0_i32_1 = arith.constant 0 : i32
    return %c0_i32, %c0_i32_0 : i32, i32
  }
  func.func @transform_4(%arg0: i32, %arg1: i32, %arg2: memref<2xi32, #tpu.memory_space<smem>>) -> (i32, i32) {
    %c0_i32 = arith.constant 0 : i32
    %c0_i32_0 = arith.constant 0 : i32
    %c0_i32_1 = arith.constant 0 : i32
    return %c0_i32, %c0_i32_0 : i32, i32
  }
  func.func @transform_5(%arg0: i32, %arg1: i32, %arg2: memref<2xi32, #tpu.memory_space<smem>>) -> (i32, i32, i32) {
    %c0_i32 = arith.constant 0 : i32
    %c0_i32_0 = arith.constant 0 : i32
    %c0_i32_1 = arith.constant 0 : i32
    return %arg0, %c0_i32, %c0_i32_0 : i32, i32, i32
  }
}

</mosaic_0001>

<llo_original>
// kernel: tpu_custom_call.1
$region0: #{tpu_custom_call.1}
  #allocation0 [shape = 'u32[]', space=smem, size = 0x4, offset = 0x4, fixed_abs, tag = 'smem constant byte address 0x4 - core index']
  #allocation1 [shape = 'u32[72,128]{1,0:T(1,128)}', space=vmem, size = 0x9000, scoped, tag = 'internal scratch']
  #allocation2 [shape = 'f32[64,1]{1,0:T(8,128)}', space=vmem, size = 0x8000, scoped, tag = 'scratch operand']
  #allocation3 [shape = 'f32[64,1]{1,0:T(8,128)}', space=vmem, size = 0x8000, scoped, tag = 'scratch operand']
  #allocation4 [shape = 'f32[64,128]{1,0:T(8,128)}', space=vmem, size = 0x8000, scoped, tag = 'scratch operand']
  #allocation5 [shape = 's32[1]{0}', space=sflag, size = 0x4, scoped, tag = 'scoped memory for tpu_custom_call.1']
  #allocation6 [shape = 'u8[512]{0}', space=smem, size = 0x200, scoped, tag = 'prefetched SMEM operand 0']
  %s0 = inlined_call_operand.hbm [shape: s32[2], index: 0, kind: input, shape index: {}]
  %s1 = inlined_call_operand.hbm [shape: bf16[64,128], index: 1, kind: input, shape index: {}]
  %s2 = inlined_call_operand.hbm [shape: bf16[2,128,128], index: 2, kind: input, shape index: {}]
  %s3 = inlined_call_operand.hbm [shape: bf16[128,128], index: 3, kind: input, shape index: {}]
  %s4 = inlined_call_operand.hbm [shape: bf16[128,128], index: 4, kind: input, shape index: {}]
  %s5 = inlined_call_operand.vmem [shape: f32[1,128], index: 5, kind: input, shape index: {}]
  %s6 = inlined_call_operand.hbm [shape: f32[2,8,128], index: 6, kind: output, shape index: {}]
  %s7 = sld [smem:[#allocation0]]
  $region81: #{tpu_custom_call.1} parent=0
    _
  %s9 = ssub.s32 1, %s7
  %s10 = scalar_select 0, %s9, %s7
  %s12 = sshll.u32 %s0, 4
  %s13 = int_to_ptr.hbm [resolvable:$true] %s12
  %15 = dma.hbm_to_smem %s13, 16, [#allocation6], [#allocation5]
  %17 = dma.done [#allocation5], 16
  %18 = sfence
  $region1: #{tpu_custom_call.1} parent=0
    #allocation7 [shape = 'u8[16384]{0}', space=vmem, size = 0x4000, scoped, tag = 'input window, operand 1, single buffered']
    #allocation8 [shape = 's32[2]{0}', space=sflag, size = 0x8, scoped, tag = 'scoped memory for tpu_custom_call.1']
    #allocation9 [shape = 's32[2]{0}', space=sflag, size = 0x8, scoped, tag = 'scoped memory for tpu_custom_call.1']
    #allocation10 [shape = 'u8[65536]{0}', space=vmem, size = 0x10000, scoped, tag = 'input window, operand 2']
    #allocation11 [shape = 's32[2]{0}', space=sflag, size = 0x8, scoped, tag = 'scoped memory for tpu_custom_call.1']
    #allocation12 [shape = 'u8[32768]{0}', space=vmem, size = 0x8000, scoped, tag = 'input window, operand 3, single buffered']
    #allocation13 [shape = 'u8[32768]{0}', space=vmem, size = 0x8000, scoped, tag = 'input window, operand 4, single buffered']
    #allocation14 [shape = 's32[1]{0}', space=sflag, size = 0x4, scoped, tag = 'scoped memory for tpu_custom_call.1']
    #allocation15 [shape = 'u8[8192]{0}', space=vmem, size = 0x2000, scoped, tag = 'output window, operand 0']
    %19 = vsyncpa [#allocation8], 0
    %20 = vsyncpa [#allocation11], 0
    %s21 = scalar_lea.sflag [#allocation11], 1
    %22 = vsyncpa %s21, 0
    %23 = vsyncpa [#allocation14], 0
    %24 = vsyncpa [#allocation9], 0
    %s25 = scalar_lea.sflag [#allocation9], 1
    %26 = vsyncpa %s25, 0
    loop: start=0, step=1, limit=4
    $region2: #{tpu_custom_call.1} parent=1 // loop_pre_header
      _
    $region3: #{tpu_custom_call.1} parent=1 // loop_header
      %s28 = sphi 0, %s32
      %p29 = scmp.ge.s32.totalorder %s28, 4
      %s35 = sphi 0, %s47
      %s36 = sphi 0, %s43
      %s37 = sphi 0, %s35
      %s38 = sphi 0, %s36
      %s39 = sphi 0, %s37
      %s40 = sphi 0, %s38
      %s48 = sphi 0, %s48
      %s50 = sphi 0, %s48
      %s51 = sphi 0, %s50
      %s65 = sphi 0, %s51
      %s73 = sphi 0, %s75
      %s76 = sphi 0, %s73
      %s77 = sphi 0, %s76
      %s93 = sphi 0, %s77
      %s97 = sphi 0, %s97
      %s99 = sphi 0, %s97
      %s100 = sphi 0, %s99
      %s114 = sphi 0, %s100
      %s118 = sphi 0, %s118
      %s120 = sphi 0, %s118
      %s121 = sphi 0, %s120
      %s135 = sphi 0, %s121
      %s139 = sphi 0, %s139
      %s141 = sphi 0, %s139
      %s142 = sphi 0, %s141
      %s156 = sphi 0, %s142
      %s162 = sphi 0, %s164
      %s165 = sphi 0, %s162
      %s166 = sphi 0, %s165
      %s182 = sphi 0, %s166
    $region4: #{tpu_custom_call.1} parent=1 // loop_header_branch
      %31 = sbr.rel (%p29) target = $region8
    $region5: #{tpu_custom_call.1} parent=1 // loop_body
      %s33 = ssub.s32 %s28, 1
      %s34 = ssub.s32 %s28, 2
      %s41 = sadd.s32 1, %s36
      %p42 = scmp.ge.s32.totalorder %s41, 1
      %s43 = scalar_select %p42, 0, %s41
      %s44 = sadd.s32 1, %s35
      %s45 = scalar_select %p42, %s44, %s35
      %p46 = scmp.ge.s32.totalorder %s45, 2
      %s47 = scalar_select %p46, 0, %s45
      %s49 = sadd.s32 %s48, 1
      %p52 = scmp.eq.s32.totalorder %s28, 1
      %p53 = scmp.ne.s32.totalorder %s48, %s50
      %p54 = scmp.eq.s32.totalorder %s28, 0
      %p55 = por %p53, %p54
      %p56 = scmp.ne.s32.totalorder %s48, %s50
      %p57 = scmp.eq.s32.totalorder %s33, 1
      %p58 = por %p56, %p57
      %p59 = scmp.ne.s32.totalorder %s50, %s51
      %p60 = scmp.eq.s32.totalorder %s33, 0
      %p61 = por %p59, %p60
      %p62 = scmp.ne.s32.totalorder %s50, %s51
      %p63 = scmp.eq.s32.totalorder %s34, 1
      %p64 = por %p62, %p63
      %p66 = scmp.ne.s32.totalorder %s51, %s65
      %p67 = scmp.eq.s32.totalorder %s34, 0
      %p68 = por %p66, %p67
      %s69 = ssub.s32 %s35, %s47
      %s70 = ssub.s32 %s36, %s43
      %s71 = sor.u32 %s69, %s70
      %p72 = scmp.eq.s32.totalorder %s71, 0
      %s74 = sadd.s32 %s73, 1
      %s75 = scalar_select %p72, %s73, %s74
      %p78 = pneg %p72
      %p79 = scmp.eq.s32.totalorder %s28, 1
      %p80 = por %p78, %p79
      %p81 = scmp.ne.s32.totalorder %s73, %s76
      %p82 = scmp.eq.s32.totalorder %s28, 0
      %p83 = por %p81, %p82
      %p84 = scmp.ne.s32.totalorder %s73, %s76
      %p85 = scmp.eq.s32.totalorder %s33, 1
      %p86 = por %p84, %p85
      %p87 = scmp.ne.s32.totalorder %s76, %s77
      %p88 = scmp.eq.s32.totalorder %s33, 0
      %p89 = por %p87, %p88
      %p90 = scmp.ne.s32.totalorder %s76, %s77
      %p91 = scmp.eq.s32.totalorder %s34, 1
      %p92 = por %p90, %p91
      %p94 = scmp.ne.s32.totalorder %s77, %s93
      %p95 = scmp.eq.s32.totalorder %s34, 0
      %p96 = por %p94, %p95
      %s98 = sadd.s32 %s97, 1
      %p101 = scmp.eq.s32.totalorder %s28, 1
      %p102 = scmp.ne.s32.totalorder %s97, %s99
      %p103 = scmp.eq.s32.totalorder %s28, 0
      %p104 = por %p102, %p103
      %p105 = scmp.ne.s32.totalorder %s97, %s99
      %p106 = scmp.eq.s32.totalorder %s33, 1
      %p107 = por %p105, %p106
      %p108 = scmp.ne.s32.totalorder %s99, %s100
      %p109 = scmp.eq.s32.totalorder %s33, 0
      %p110 = por %p108, %p109
      %p111 = scmp.ne.s32.totalorder %s99, %s100
      %p112 = scmp.eq.s32.totalorder %s34, 1
      %p113 = por %p111, %p112
      %p115 = scmp.ne.s32.totalorder %s100, %s114
      %p116 = scmp.eq.s32.totalorder %s34, 0
      %p117 = por %p115, %p116
      %s119 = sadd.s32 %s118, 1
      %p122 = scmp.eq.s32.totalorder %s28, 1
      %p123 = scmp.ne.s32.totalorder %s118, %s120
      %p124 = scmp.eq.s32.totalorder %s28, 0
      %p125 = por %p123, %p124
      %p126 = scmp.ne.s32.totalorder %s118, %s120
      %p127 = scmp.eq.s32.totalorder %s33, 1
      %p128 = por %p126, %p127
      %p129 = scmp.ne.s32.totalorder %s120, %s121
      %p130 = scmp.eq.s32.totalorder %s33, 0
      %p131 = por %p129, %p130
      %p132 = scmp.ne.s32.totalorder %s120, %s121
      %p133 = scmp.eq.s32.totalorder %s34, 1
      %p134 = por %p132, %p133
      %p136 = scmp.ne.s32.totalorder %s121, %s135
      %p137 = scmp.eq.s32.totalorder %s34, 0
      %p138 = por %p136, %p137
      %s140 = sadd.s32 %s139, 1
      %p143 = scmp.eq.s32.totalorder %s28, 1
      %p144 = scmp.ne.s32.totalorder %s139, %s141
      %p145 = scmp.eq.s32.totalorder %s28, 0
      %p146 = por %p144, %p145
      %p147 = scmp.ne.s32.totalorder %s139, %s141
      %p148 = scmp.eq.s32.totalorder %s33, 1
      %p149 = por %p147, %p148
      %p150 = scmp.ne.s32.totalorder %s141, %s142
      %p151 = scmp.eq.s32.totalorder %s33, 0
      %p152 = por %p150, %p151
      %p153 = scmp.ne.s32.totalorder %s141, %s142
      %p154 = scmp.eq.s32.totalorder %s34, 1
      %p155 = por %p153, %p154
      %p157 = scmp.ne.s32.totalorder %s142, %s156
      %p158 = scmp.eq.s32.totalorder %s34, 0
      %p159 = por %p157, %p158
      %s160 = ssub.s32 %s35, %s47
      %p161 = scmp.eq.s32.totalorder %s160, 0
      %s163 = sadd.s32 %s162, 1
      %s164 = scalar_select %p161, %s162, %s163
      %p167 = pneg %p161
      %p168 = scmp.eq.s32.totalorder %s28, 1
      %p169 = por %p167, %p168
      %p170 = scmp.ne.s32.totalorder %s162, %s165
      %p171 = scmp.eq.s32.totalorder %s28, 0
      %p172 = por %p170, %p171
      %p173 = scmp.ne.s32.totalorder %s162, %s165
      %p174 = scmp.eq.s32.totalorder %s33, 1
      %p175 = por %p173, %p174
      %p176 = scmp.ne.s32.totalorder %s165, %s166
      %p177 = scmp.eq.s32.totalorder %s33, 0
      %p178 = por %p176, %p177
      %p179 = scmp.ne.s32.totalorder %s165, %s166
      %p180 = scmp.eq.s32.totalorder %s34, 1
      %p181 = por %p179, %p180
      %p183 = scmp.ne.s32.totalorder %s166, %s182
      %p184 = scmp.eq.s32.totalorder %s34, 0
      %p185 = por %p183, %p184
      %p186 = scmp.le.s32.totalorder 1, %s28
      %p187 = scmp.lt.s32.totalorder %s28, 3
      %p188 = pnand %p186, %p187
      %p189 = pneg %p188
      // Predicated region
      $region9: #{tpu_custom_call.1} parent=5 // pred_check
        _
      $region10: #{tpu_custom_call.1} parent=5 // pred_check_branch
        %191 = sbr.rel (%p188) target = $region12
      $region11: #{tpu_custom_call.1} parent=5 // pred_region
        %s192 = ssub.s32 %s28, 1
        // Predicated region
        $region13: #{tpu_custom_call.1} parent=11 // pred_check
          %p193 = pneg %p61
        $region14: #{tpu_custom_call.1} parent=11 // pred_check_branch
          %195 = sbr.rel (%p193) target = $region16
        $region15: #{tpu_custom_call.1} parent=11 // pred_region
          %197 = vsyncadd [#allocation8], 0
          %s198 = sshll.u32 %s1, 4
          %s199 = int_to_ptr.hbm [resolvable:$true] %s198
          %s200 = sshll.u32 [#allocation7], 4
          %s201 = int_to_ptr.vmem [resolvable:$true] %s200
          %206 = dma.hbm_to_vmem [thread:$0]  %s199, 512, %s201, [#allocation8], 64, 64, 4
        $region16: #{tpu_custom_call.1} parent=11 // pred_fallthru
          _
        // Predicated region
        $region17: #{tpu_custom_call.1} parent=11 // pred_check
          %p207 = pneg %p110
        $region18: #{tpu_custom_call.1} parent=11 // pred_check_branch
          %209 = sbr.rel (%p207) target = $region20
        $region19: #{tpu_custom_call.1} parent=11 // pred_region
          %211 = vsyncadd [#allocation11], 0
          %s212 = sshll.u32 %s3, 4
          %s213 = int_to_ptr.hbm [resolvable:$true] %s212
          %s214 = sshll.u32 [#allocation12], 4
          %s215 = int_to_ptr.vmem [resolvable:$true] %s214
          %220 = dma.hbm_to_vmem [thread:$0]  %s213, 1024, %s215, [#allocation11], 64, 64, 4
        $region20: #{tpu_custom_call.1} parent=11 // pred_fallthru
          _
        // Predicated region
        $region21: #{tpu_custom_call.1} parent=11 // pred_check
          %p221 = pneg %p131
        $region22: #{tpu_custom_call.1} parent=11 // pred_check_branch
          %223 = sbr.rel (%p221) target = $region24
        $region23: #{tpu_custom_call.1} parent=11 // pred_region
          %225 = vsyncadd [#allocation14], 0
          %s226 = sshll.u32 %s4, 4
          %s227 = int_to_ptr.hbm [resolvable:$true] %s226
          %s228 = sshll.u32 [#allocation13], 4
          %s229 = int_to_ptr.vmem [resolvable:$true] %s228
          %234 = dma.hbm_to_vmem [thread:$0]  %s227, 1024, %s229, [#allocation14], 64, 64, 4
        $region24: #{tpu_custom_call.1} parent=11 // pred_fallthru
          _
        // Predicated region
        $region25: #{tpu_custom_call.1} parent=11 // pred_check
          %p235 = pneg %p152
        $region26: #{tpu_custom_call.1} parent=11 // pred_check_branch
          %237 = sbr.rel (%p235) target = $region28
        $region27: #{tpu_custom_call.1} parent=11 // pred_region
          _
        $region28: #{tpu_custom_call.1} parent=11 // pred_fallthru
          _
      $region12: #{tpu_custom_call.1} parent=5 // pred_fallthru
        _
      %p238 = scmp.lt.s32.totalorder %s28, 2
      // Predicated region
      $region29: #{tpu_custom_call.1} parent=5 // pred_check
        %p239 = pneg %p238
      $region30: #{tpu_custom_call.1} parent=5 // pred_check_branch
        %241 = sbr.rel (%p239) target = $region32
      $region31: #{tpu_custom_call.1} parent=5 // pred_region
        // Predicated region
        $region33: #{tpu_custom_call.1} parent=31 // pred_check
          %p242 = pneg %p83
        $region34: #{tpu_custom_call.1} parent=31 // pred_check_branch
          %244 = sbr.rel (%p242) target = $region36
        $region35: #{tpu_custom_call.1} parent=31 // pred_region
          %s245 = sand.u32 %s28, 1
          %s246 = scalar_lea.sflag [#allocation11], %s245
          %s247 = sand.u32 %s73, 1
          %s248 = smul.addr %s247, 64
          %s249 = scalar_lea.vmem [#allocation10], %s248
          %s250 = smul.u32 16, %s36
          %252 = vsyncadd %s246, 0
          %s253 = smul.addr %s35, 16
          %s254 = sadd.s32 %s250, %s253
          %s255 = smul.addr %s254, 4
          %s256 = scalar_lea.hbm %s2, %s255
          %s257 = sshll.u32 %s256, 4
          %s258 = int_to_ptr.hbm [resolvable:$true] %s257
          %s259 = sshll.u32 %s249, 4
          %s260 = int_to_ptr.vmem [resolvable:$true] %s259
          %265 = dma.hbm_to_vmem [thread:$0]  %s258, 1024, %s260, %s246, 64, 64, 4
        $region36: #{tpu_custom_call.1} parent=31 // pred_fallthru
          _
      $region32: #{tpu_custom_call.1} parent=5 // pred_fallthru
        _
      %p266 = scmp.le.s32.totalorder 1, %s28
      %p267 = scmp.lt.s32.totalorder %s28, 3
      %p268 = pnand %p266, %p267
      %p269 = pneg %p268
      // Predicated region
      $region37: #{tpu_custom_call.1} parent=5 // pred_check
        _
      $region38: #{tpu_custom_call.1} parent=5 // pred_check_branch
        %271 = sbr.rel (%p268) target = $region40
      $region39: #{tpu_custom_call.1} parent=5 // pred_region
        %s272 = ssub.s32 %s28, 1
        // Predicated region
        $region41: #{tpu_custom_call.1} parent=39 // pred_check
          %p273 = pneg %p61
        $region42: #{tpu_custom_call.1} parent=39 // pred_check_branch
          %275 = sbr.rel (%p273) target = $region44
        $region43: #{tpu_custom_call.1} parent=39 // pred_region
          %277 = dma.done [#allocation8], 512
        $region44: #{tpu_custom_call.1} parent=39 // pred_fallthru
          _
        %s278 = sand.u32 %s33, 1
        %s279 = scalar_lea.sflag [#allocation11], %s278
        %s280 = sand.u32 %s76, 1
        %s281 = smul.addr %s280, 64
        %s282 = scalar_lea.vmem [#allocation10], %s281
        // Predicated region
        $region45: #{tpu_custom_call.1} parent=39 // pred_check
          %p283 = pneg %p89
        $region46: #{tpu_custom_call.1} parent=39 // pred_check_branch
          %285 = sbr.rel (%p283) target = $region48
        $region47: #{tpu_custom_call.1} parent=39 // pred_region
          %287 = dma.done %s279, 1024
        $region48: #{tpu_custom_call.1} parent=39 // pred_fallthru
          _
        // Predicated region
        $region49: #{tpu_custom_call.1} parent=39 // pred_check
          %p288 = pneg %p110
        $region50: #{tpu_custom_call.1} parent=39 // pred_check_branch
          %290 = sbr.rel (%p288) target = $region52
        $region51: #{tpu_custom_call.1} parent=39 // pred_region
          %292 = dma.done [#allocation11], 1024
        $region52: #{tpu_custom_call.1} parent=39 // pred_fallthru
          _
        // Predicated region
        $region53: #{tpu_custom_call.1} parent=39 // pred_check
          %p293 = pneg %p131
        $region54: #{tpu_custom_call.1} parent=39 // pred_check_branch
          %295 = sbr.rel (%p293) target = $region56
        $region55: #{tpu_custom_call.1} parent=39 // pred_region
          %297 = dma.done [#allocation14], 1024
        $region56: #{tpu_custom_call.1} parent=39 // pred_fallthru
          _
        %p298 = pneg %p61
        %p299 = pneg %p58
        %s300 = sand.u32 %s33, 1
        %s301 = scalar_lea.sflag [#allocation11], %s300
        %s302 = sand.u32 %s76, 1
        %s303 = smul.addr %s302, 64
        %s304 = scalar_lea.vmem [#allocation10], %s303
        %p305 = pneg %p89
        %p306 = pneg %p86
        %p307 = pneg %p110
        %p308 = pneg %p107
        %p309 = pneg %p131
        %p310 = pneg %p128
        %p311 = pneg %p152
        %p312 = pneg %p149
        %p313 = pneg %p178
        %p314 = pneg %p175
        %s315 = sand.u32 %s165, 1
        %s316 = scalar_lea.sflag [#allocation9], %s315
        %s317 = sand.u32 %s165, 1
        %s318 = smul.addr %s317, 8
        %s319 = scalar_lea.vmem [#allocation15], %s318
        %s320 = smul.u32 16, %s38
        %s321 = sld [smem:[#allocation6 + %s37]]
        %p322 = scmp.eq.s32.totalorder %s38, 0
        // Predicated region
        $region57: #{tpu_custom_call.1} parent=39 // pred_check
          %p323 = pneg %p322
        $region58: #{tpu_custom_call.1} parent=39 // pred_check_branch
          %325 = sbr.rel (%p323) target = $region60
        $region59: #{tpu_custom_call.1} parent=39 // pred_region
          %vm326 = vcmask 7168
          %327 = vst.msk [vmem:[#allocation2] sm:$0xff] %vm326, -1e+30
          %328 = vst.msk [vmem:[#allocation2 + $0x8] sm:$0xff] %vm326, -1e+30
          %329 = vst.msk [vmem:[#allocation2 + $0x10] sm:$0xff] %vm326, -1e+30
          %330 = vst.msk [vmem:[#allocation2 + $0x18] sm:$0xff] %vm326, -1e+30
          %331 = vst.msk [vmem:[#allocation2 + $0x20] sm:$0xff] %vm326, -1e+30
          %332 = vst.msk [vmem:[#allocation2 + $0x28] sm:$0xff] %vm326, -1e+30
          %333 = vst.msk [vmem:[#allocation2 + $0x30] sm:$0xff] %vm326, -1e+30
          %334 = vst.msk [vmem:[#allocation2 + $0x38] sm:$0xff] %vm326, -1e+30
          %335 = vst.msk [vmem:[#allocation3] sm:$0xff] %vm326, 0.0
          %336 = vst.msk [vmem:[#allocation3 + $0x8] sm:$0xff] %vm326, 0.0
          %337 = vst.msk [vmem:[#allocation3 + $0x10] sm:$0xff] %vm326, 0.0
          %338 = vst.msk [vmem:[#allocation3 + $0x18] sm:$0xff] %vm326, 0.0
          %339 = vst.msk [vmem:[#allocation3 + $0x20] sm:$0xff] %vm326, 0.0
          %340 = vst.msk [vmem:[#allocation3 + $0x28] sm:$0xff] %vm326, 0.0
          %341 = vst.msk [vmem:[#allocation3 + $0x30] sm:$0xff] %vm326, 0.0
          %342 = vst.msk [vmem:[#allocation3 + $0x38] sm:$0xff] %vm326, 0.0
          %343 = vst [vmem:[#allocation4] sm:$0xff] 0.0
          %344 = vst [vmem:[#allocation4 + $0x8] sm:$0xff] 0.0
          %345 = vst [vmem:[#allocation4 + $0x10] sm:$0xff] 0.0
          %346 = vst [vmem:[#allocation4 + $0x18] sm:$0xff] 0.0
          %347 = vst [vmem:[#allocation4 + $0x20] sm:$0xff] 0.0
          %348 = vst [vmem:[#allocation4 + $0x28] sm:$0xff] 0.0
          %349 = vst [vmem:[#allocation4 + $0x30] sm:$0xff] 0.0
          %350 = vst [vmem:[#allocation4 + $0x38] sm:$0xff] 0.0
        $region60: #{tpu_custom_call.1} parent=39 // pred_fallthru
          _
        %s351 = smul.u32 %s38, 128
        %p352 = scmp.lt.s32.totalorder %s351, %s321
        // Predicated region
        $region61: #{tpu_custom_call.1} parent=39 // pred_check
          %p353 = pneg %p352
        $region62: #{tpu_custom_call.1} parent=39 // pred_check_branch
          %355 = sbr.rel (%p353) target = $region64
        $region63: #{tpu_custom_call.1} parent=39 // pred_region
          %v356 = vld [vmem:[%s282] sm:$0xf]
          %v357 = vld [vmem:[%s282 + $0x4] sm:$0xf]
          %v358 = vld [vmem:[%s282 + $0x8] sm:$0xf]
          %v359 = vld [vmem:[%s282 + $0xc] sm:$0xf]
          %v360 = vld [vmem:[%s282 + $0x10] sm:$0xf]
          %v361 = vld [vmem:[%s282 + $0x14] sm:$0xf]
          %v362 = vld [vmem:[%s282 + $0x18] sm:$0xf]
          %v363 = vld [vmem:[%s282 + $0x1c] sm:$0xf]
          %v364 = vld [vmem:[%s282 + $0x20] sm:$0xf]
          %v365 = vld [vmem:[%s282 + $0x24] sm:$0xf]
          %v366 = vld [vmem:[%s282 + $0x28] sm:$0xf]
          %v367 = vld [vmem:[%s282 + $0x2c] sm:$0xf]
          %v368 = vld [vmem:[%s282 + $0x30] sm:$0xf]
          %v369 = vld [vmem:[%s282 + $0x34] sm:$0xf]
          %v370 = vld [vmem:[%s282 + $0x38] sm:$0xf]
          %v371 = vld [vmem:[%s282 + $0x3c] sm:$0xf]
          %v372 = vld [vmem:[#allocation12] sm:$0xf]
          %v373 = vld [vmem:[#allocation12 + $0x4] sm:$0xf]
          %v374 = vld [vmem:[#allocation12 + $0x8] sm:$0xf]
          %v375 = vld [vmem:[#allocation12 + $0xc] sm:$0xf]
          %v376 = vld [vmem:[#allocation12 + $0x10] sm:$0xf]
          %v377 = vld [vmem:[#allocation12 + $0x14] sm:$0xf]
          %v378 = vld [vmem:[#allocation12 + $0x18] sm:$0xf]
          %v379 = vld [vmem:[#allocation12 + $0x1c] sm:$0xf]
          %v380 = vld [vmem:[#allocation12 + $0x20] sm:$0xf]
          %v381 = vld [vmem:[#allocation12 + $0x24] sm:$0xf]
          %v382 = vld [vmem:[#allocation12 + $0x28] sm:$0xf]
          %v383 = vld [vmem:[#allocation12 + $0x2c] sm:$0xf]
          %v384 = vld [vmem:[#allocation12 + $0x30] sm:$0xf]
          %v385 = vld [vmem:[#allocation12 + $0x34] sm:$0xf]
          %v386 = vld [vmem:[#allocation12 + $0x38] sm:$0xf]
          %v387 = vld [vmem:[#allocation12 + $0x3c] sm:$0xf]
          %v404 = vunpack.c.l.b16 %v356
          %v405 = vunpack.c.l.b16 %v357
          %v406 = vunpack.c.l.b16 %v358
          %v407 = vunpack.c.l.b16 %v359
          %v408 = vunpack.c.l.b16 %v360
          %v409 = vunpack.c.l.b16 %v361
          %v410 = vunpack.c.l.b16 %v362
          %v411 = vunpack.c.l.b16 %v363
          %v412 = vunpack.c.l.b16 %v364
          %v413 = vunpack.c.l.b16 %v365
          %v414 = vunpack.c.l.b16 %v366
          %v415 = vunpack.c.l.b16 %v367
          %v416 = vunpack.c.l.b16 %v368
          %v417 = vunpack.c.l.b16 %v369
          %v418 = vunpack.c.l.b16 %v370
          %v419 = vunpack.c.l.b16 %v371
          %v420 = vpack.c.b16 %v405, %v404
          %v421 = vpack.c.b16 %v407, %v406
          %v422 = vpack.c.b16 %v409, %v408
          %v423 = vpack.c.b16 %v411, %v410
          %v424 = vpack.c.b16 %v413, %v412
          %v425 = vpack.c.b16 %v415, %v414
          %v426 = vpack.c.b16 %v417, %v416
          %v427 = vpack.c.b16 %v419, %v418
          %v452 = vunpack.c.l.b16 %v372
          %v453 = vunpack.c.l.b16 %v373
          %v454 = vunpack.c.l.b16 %v374
          %v455 = vunpack.c.l.b16 %v375
          %v456 = vunpack.c.l.b16 %v376
          %v457 = vunpack.c.l.b16 %v377
          %v458 = vunpack.c.l.b16 %v378
          %v459 = vunpack.c.l.b16 %v379
          %v460 = vunpack.c.l.b16 %v380
          %v461 = vunpack.c.l.b16 %v381
          %v462 = vunpack.c.l.b16 %v382
          %v463 = vunpack.c.l.b16 %v383
          %v464 = vunpack.c.l.b16 %v384
          %v465 = vunpack.c.l.b16 %v385
          %v466 = vunpack.c.l.b16 %v386
          %v467 = vunpack.c.l.b16 %v387
          %v468 = vpack.c.b16 %v453, %v452
          %v469 = vpack.c.b16 %v455, %v454
          %v470 = vpack.c.b16 %v457, %v456
          %v471 = vpack.c.b16 %v459, %v458
          %v472 = vpack.c.b16 %v461, %v460
          %v473 = vpack.c.b16 %v463, %v462
          %v474 = vpack.c.b16 %v465, %v464
          %v475 = vpack.c.b16 %v467, %v466
          %484 = vmatpush.bf16.msra.mxu0 %v475
          %485 = vmatpush.bf16.msra.mxu0 %v474
          %486 = vmatpush.bf16.msra.mxu0 %v473
          %487 = vmatpush.bf16.msra.mxu0 %v472
          %488 = vmatpush.bf16.msra.mxu0 %v471
          %489 = vmatpush.bf16.msra.mxu0 %v470
          %490 = vmatpush.bf16.msra.mxu0 %v469
          %491 = vmatpush.bf16.msra.mxu0 %v468
          %492 = vmatmul.bf16.gmra.mxu0 %v420
          %v493 = vpop.f32.mrf.mxu0
          %v494 = vadd.f32 0.0, %v493
          %v495 = vpop.f32.mrf.mxu0
          %v496 = vadd.f32 0.0, %v495
          %497 = vmatmul.bf16.gmra.mxu0 %v421
          %v498 = vpop.f32.mrf.mxu0
          %v499 = vadd.f32 0.0, %v498
          %v500 = vpop.f32.mrf.mxu0
          %v501 = vadd.f32 0.0, %v500
          %502 = vmatmul.bf16.gmra.mxu0 %v422
          %v503 = vpop.f32.mrf.mxu0
          %v504 = vadd.f32 0.0, %v503
          %v505 = vpop.f32.mrf.mxu0
          %v506 = vadd.f32 0.0, %v505
          %507 = vmatmul.bf16.gmra.mxu0 %v423
          %v508 = vpop.f32.mrf.mxu0
          %v509 = vadd.f32 0.0, %v508
          %v510 = vpop.f32.mrf.mxu0
          %v511 = vadd.f32 0.0, %v510
          %512 = vmatmul.bf16.gmra.mxu0 %v424
          %v513 = vpop.f32.mrf.mxu0
          %v514 = vadd.f32 0.0, %v513
          %v515 = vpop.f32.mrf.mxu0
          %v516 = vadd.f32 0.0, %v515
          %517 = vmatmul.bf16.gmra.mxu0 %v425
          %v518 = vpop.f32.mrf.mxu0
          %v519 = vadd.f32 0.0, %v518
          %v520 = vpop.f32.mrf.mxu0
          %v521 = vadd.f32 0.0, %v520
          %522 = vmatmul.bf16.gmra.mxu0 %v426
          %v523 = vpop.f32.mrf.mxu0
          %v524 = vadd.f32 0.0, %v523
          %v525 = vpop.f32.mrf.mxu0
          %v526 = vadd.f32 0.0, %v525
          %527 = vmatmul.bf16.gmra.mxu0 %v427
          %v528 = vpop.f32.mrf.mxu0
          %v529 = vadd.f32 0.0, %v528
          %v530 = vpop.f32.mrf.mxu0
          %v531 = vadd.f32 0.0, %v530
          %532 = vdwg.mxu0
          %v533 = vpack.c.bf16 %v496, %v494
          %v534 = vpack.c.bf16 %v501, %v499
          %v535 = vpack.c.bf16 %v506, %v504
          %v536 = vpack.c.bf16 %v511, %v509
          %v537 = vpack.c.bf16 %v516, %v514
          %v538 = vpack.c.bf16 %v521, %v519
          %v539 = vpack.c.bf16 %v526, %v524
          %v540 = vpack.c.bf16 %v531, %v529
          %v541 = vld [vmem:[#allocation7] sm:$0xf]
          %v542 = vld [vmem:[#allocation7 + $0x4] sm:$0xf]
          %v543 = vld [vmem:[#allocation7 + $0x8] sm:$0xf]
          %v544 = vld [vmem:[#allocation7 + $0xc] sm:$0xf]
          %v545 = vld [vmem:[#allocation7 + $0x10] sm:$0xf]
          %v546 = vld [vmem:[#allocation7 + $0x14] sm:$0xf]
          %v547 = vld [vmem:[#allocation7 + $0x18] sm:$0xf]
          %v548 = vld [vmem:[#allocation7 + $0x1c] sm:$0xf]
          %v549 = vlaneseq
          %v550 = vand.u32 %v549, 127
          %v551 = vstv %s351
          %v552 = vadd.s32 %v550, %v551
          %v553 = vstv %s321
          %vm554 = vcmp.lt.s32.totalorder %v552, %v553
          %v555 = vsel %vm554, 0.0, -1e+30
          %v564 = vunpack.c.l.b16 %v541
          %v565 = vunpack.c.l.b16 %v542
          %v566 = vunpack.c.l.b16 %v543
          %v567 = vunpack.c.l.b16 %v544
          %v568 = vunpack.c.l.b16 %v545
          %v569 = vunpack.c.l.b16 %v546
          %v570 = vunpack.c.l.b16 %v547
          %v571 = vunpack.c.l.b16 %v548
          %v572 = vpack.c.b16 %v565, %v564
          %v573 = vpack.c.b16 %v567, %v566
          %v574 = vpack.c.b16 %v569, %v568
          %v575 = vpack.c.b16 %v571, %v570
          %580 = vmatpush.bf16.xpose.msra.mxu0 %v427
          %581 = vmatpush.bf16.xpose.msra.mxu0 %v426
          %582 = vmatpush.bf16.xpose.msra.mxu0 %v425
          %583 = vmatpush.bf16.xpose.msra.mxu0 %v424
          %584 = vmatpush.bf16.xpose.msra.mxu0 %v423
          %585 = vmatpush.bf16.xpose.msra.mxu0 %v422
          %586 = vmatpush.bf16.xpose.msra.mxu0 %v421
          %587 = vmatpush.bf16.xpose.msra.mxu0 %v420
          %588 = vmatmul.bf16.gmra.mxu0 %v572
          %v589 = vpop.f32.mrf.mxu0
          %v590 = vadd.f32 %v555, %v589
          %v591 = vpop.f32.mrf.mxu0
          %v592 = vadd.f32 %v555, %v591
          %593 = vmatmul.bf16.gmra.mxu0 %v573
          %v594 = vpop.f32.mrf.mxu0
          %v595 = vadd.f32 %v555, %v594
          %v596 = vpop.f32.mrf.mxu0
          %v597 = vadd.f32 %v555, %v596
          %598 = vmatmul.bf16.gmra.mxu0 %v574
          %v599 = vpop.f32.mrf.mxu0
          %v600 = vadd.f32 %v555, %v599
          %v601 = vpop.f32.mrf.mxu0
          %v602 = vadd.f32 %v555, %v601
          %603 = vmatmul.bf16.gmra.mxu0 %v575
          %v604 = vpop.f32.mrf.mxu0
          %v605 = vadd.f32 %v555, %v604
          %v606 = vpop.f32.mrf.mxu0
          %v607 = vadd.f32 %v555, %v606
          %608 = vdwg.mxu0
          %v609 = vld [vmem:[#allocation2] sm:$0xff]
          %v610 = vld [vmem:[#allocation2 + $0x8] sm:$0xff]
          %v611 = vld [vmem:[#allocation2 + $0x10] sm:$0xff]
          %v612 = vld [vmem:[#allocation2 + $0x18] sm:$0xff]
          %v613 = vld [vmem:[#allocation2 + $0x20] sm:$0xff]
          %v614 = vld [vmem:[#allocation2 + $0x28] sm:$0xff]
          %v615 = vld [vmem:[#allocation2 + $0x30] sm:$0xff]
          %v616 = vld [vmem:[#allocation2 + $0x38] sm:$0xff]
          %617 = vmax.xlane.f32.xlu0 %v590
          %v618 = vpop.xlane.xlu0 %617
          %619 = vmax.xlane.f32.xlu0 %v592
          %v620 = vpop.xlane.xlu0 %619
          %621 = vmax.xlane.f32.xlu0 %v595
          %v622 = vpop.xlane.xlu0 %621
          %623 = vmax.xlane.f32.xlu0 %v597
          %v624 = vpop.xlane.xlu0 %623
          %625 = vmax.xlane.f32.xlu0 %v600
          %v626 = vpop.xlane.xlu0 %625
          %627 = vmax.xlane.f32.xlu0 %v602
          %v628 = vpop.xlane.xlu0 %627
          %629 = vmax.xlane.f32.xlu0 %v605
          %v630 = vpop.xlane.xlu0 %629
          %631 = vmax.xlane.f32.xlu0 %v607
          %v632 = vpop.xlane.xlu0 %631
          %v633 = vmax.f32 %v609, %v618
          %v634 = vmax.f32 %v610, %v620
          %v635 = vmax.f32 %v611, %v622
          %v636 = vmax.f32 %v612, %v624
          %v637 = vmax.f32 %v613, %v626
          %v638 = vmax.f32 %v614, %v628
          %v639 = vmax.f32 %v615, %v630
          %v640 = vmax.f32 %v616, %v632
          %v641 = vsub.f32 %v609, %v633
          %v642 = vsub.f32 %v610, %v634
          %v643 = vsub.f32 %v611, %v635
          %v644 = vsub.f32 %v612, %v636
          %v645 = vsub.f32 %v613, %v637
          %v646 = vsub.f32 %v614, %v638
          %v647 = vsub.f32 %v615, %v639
          %v648 = vsub.f32 %v616, %v640
          %v649 = vmul.f32 %v641, 1.442695
          %v650 = vpow.pop %v649
          %v651 = vmul.f32 %v642, 1.442695
          %v652 = vpow.pop %v651
          %v653 = vmul.f32 %v643, 1.442695
          %v654 = vpow.pop %v653
          %v655 = vmul.f32 %v644, 1.442695
          %v656 = vpow.pop %v655
          %v657 = vmul.f32 %v645, 1.442695
          %v658 = vpow.pop %v657
          %v659 = vmul.f32 %v646, 1.442695
          %v660 = vpow.pop %v659
          %v661 = vmul.f32 %v647, 1.442695
          %v662 = vpow.pop %v661
          %v663 = vmul.f32 %v648, 1.442695
          %v664 = vpow.pop %v663
          %666 = vset.pattern.permute.xlu0 0
          %667 = vperm.xlu0 %666, %v633
          %v668 = vpop.permute.xlu0 %667
          %671 = vset.pattern.permute.xlu0 0
          %672 = vperm.xlu0 %671, %v634
          %v673 = vpop.permute.xlu0 %672
          %676 = vset.pattern.permute.xlu0 0
          %677 = vperm.xlu0 %676, %v635
          %v678 = vpop.permute.xlu0 %677
          %681 = vset.pattern.permute.xlu0 0
          %682 = vperm.xlu0 %681, %v636
          %v683 = vpop.permute.xlu0 %682
          %686 = vset.pattern.permute.xlu0 0
          %687 = vperm.xlu0 %686, %v637
          %v688 = vpop.permute.xlu0 %687
          %691 = vset.pattern.permute.xlu0 0
          %692 = vperm.xlu0 %691, %v638
          %v693 = vpop.permute.xlu0 %692
          %696 = vset.pattern.permute.xlu0 0
          %697 = vperm.xlu0 %696, %v639
          %v698 = vpop.permute.xlu0 %697
          %701 = vset.pattern.permute.xlu0 0
          %702 = vperm.xlu0 %701, %v640
          %v703 = vpop.permute.xlu0 %702
          %v705 = vsub.f32 %v590, %v668
          %v706 = vsub.f32 %v592, %v673
          %v707 = vsub.f32 %v595, %v678
          %v708 = vsub.f32 %v597, %v683
          %v709 = vsub.f32 %v600, %v688
          %v710 = vsub.f32 %v602, %v693
          %v711 = vsub.f32 %v605, %v698
          %v712 = vsub.f32 %v607, %v703
          %v713 = vmul.f32 %v705, 1.442695
          %v714 = vpow.pop %v713
          %v715 = vmul.f32 %v706, 1.442695
          %v716 = vpow.pop %v715
          %v717 = vmul.f32 %v707, 1.442695
          %v718 = vpow.pop %v717
          %v719 = vmul.f32 %v708, 1.442695
          %v720 = vpow.pop %v719
          %v721 = vmul.f32 %v709, 1.442695
          %v722 = vpow.pop %v721
          %v723 = vmul.f32 %v710, 1.442695
          %v724 = vpow.pop %v723
          %v725 = vmul.f32 %v711, 1.442695
          %v726 = vpow.pop %v725
          %v727 = vmul.f32 %v712, 1.442695
          %v728 = vpow.pop %v727
          %v729 = vld [vmem:[#allocation3] sm:$0xff]
          %v730 = vld [vmem:[#allocation3 + $0x8] sm:$0xff]
          %v731 = vld [vmem:[#allocation3 + $0x10] sm:$0xff]
          %v732 = vld [vmem:[#allocation3 + $0x18] sm:$0xff]
          %v733 = vld [vmem:[#allocation3 + $0x20] sm:$0xff]
          %v734 = vld [vmem:[#allocation3 + $0x28] sm:$0xff]
          %v735 = vld [vmem:[#allocation3 + $0x30] sm:$0xff]
          %v736 = vld [vmem:[#allocation3 + $0x38] sm:$0xff]
          %v737 = vmul.f32 %v650, %v729
          %v738 = vmul.f32 %v652, %v730
          %v739 = vmul.f32 %v654, %v731
          %v740 = vmul.f32 %v656, %v732
          %v741 = vmul.f32 %v658, %v733
          %v742 = vmul.f32 %v660, %v734
          %v743 = vmul.f32 %v662, %v735
          %v744 = vmul.f32 %v664, %v736
          %745 = vadd.xlane.f32.xlu0 %v714
          %v746 = vpop.xlane.xlu0 %745
          %747 = vadd.xlane.f32.xlu0 %v716
          %v748 = vpop.xlane.xlu0 %747
          %749 = vadd.xlane.f32.xlu0 %v718
          %v750 = vpop.xlane.xlu0 %749
          %751 = vadd.xlane.f32.xlu0 %v720
          %v752 = vpop.xlane.xlu0 %751
          %753 = vadd.xlane.f32.xlu0 %v722
          %v754 = vpop.xlane.xlu0 %753
          %755 = vadd.xlane.f32.xlu0 %v724
          %v756 = vpop.xlane.xlu0 %755
          %757 = vadd.xlane.f32.xlu0 %v726
          %v758 = vpop.xlane.xlu0 %757
          %759 = vadd.xlane.f32.xlu0 %v728
          %v760 = vpop.xlane.xlu0 %759
          %v761 = vadd.f32 %v737, %v746
          %v762 = vadd.f32 %v738, %v748
          %v763 = vadd.f32 %v739, %v750
          %v764 = vadd.f32 %v740, %v752
          %v765 = vadd.f32 %v741, %v754
          %v766 = vadd.f32 %v742, %v756
          %v767 = vadd.f32 %v743, %v758
          %v768 = vadd.f32 %v744, %v760
          %vm769 = vcmask 7168
          %770 = vst.msk [vmem:[#allocation3] sm:$0xff] %vm769, %v761
          %771 = vst.msk [vmem:[#allocation3 + $0x8] sm:$0xff] %vm769, %v762
          %772 = vst.msk [vmem:[#allocation3 + $0x10] sm:$0xff] %vm769, %v763
          %773 = vst.msk [vmem:[#allocation3 + $0x18] sm:$0xff] %vm769, %v764
          %774 = vst.msk [vmem:[#allocation3 + $0x20] sm:$0xff] %vm769, %v765
          %775 = vst.msk [vmem:[#allocation3 + $0x28] sm:$0xff] %vm769, %v766
          %776 = vst.msk [vmem:[#allocation3 + $0x30] sm:$0xff] %vm769, %v767
          %777 = vst.msk [vmem:[#allocation3 + $0x38] sm:$0xff] %vm769, %v768
          %v778 = vld [vmem:[#allocation4] sm:$0xff]
          %v779 = vld [vmem:[#allocation4 + $0x8] sm:$0xff]
          %v780 = vld [vmem:[#allocation4 + $0x10] sm:$0xff]
          %v781 = vld [vmem:[#allocation4 + $0x18] sm:$0xff]
          %v782 = vld [vmem:[#allocation4 + $0x20] sm:$0xff]
          %v783 = vld [vmem:[#allocation4 + $0x28] sm:$0xff]
          %v784 = vld [vmem:[#allocation4 + $0x30] sm:$0xff]
          %v785 = vld [vmem:[#allocation4 + $0x38] sm:$0xff]
          %787 = vset.pattern.permute.xlu0 0
          %788 = vperm.xlu0 %787, %v650
          %v789 = vpop.permute.xlu0 %788
          %792 = vset.pattern.permute.xlu0 0
          %793 = vperm.xlu0 %792, %v652
          %v794 = vpop.permute.xlu0 %793
          %797 = vset.pattern.permute.xlu0 0
          %798 = vperm.xlu0 %797, %v654
          %v799 = vpop.permute.xlu0 %798
          %802 = vset.pattern.permute.xlu0 0
          %803 = vperm.xlu0 %802, %v656
          %v804 = vpop.permute.xlu0 %803
          %807 = vset.pattern.permute.xlu0 0
          %808 = vperm.xlu0 %807, %v658
          %v809 = vpop.permute.xlu0 %808
          %812 = vset.pattern.permute.xlu0 0
          %813 = vperm.xlu0 %812, %v660
          %v814 = vpop.permute.xlu0 %813
          %817 = vset.pattern.permute.xlu0 0
          %818 = vperm.xlu0 %817, %v662
          %v819 = vpop.permute.xlu0 %818
          %822 = vset.pattern.permute.xlu0 0
          %823 = vperm.xlu0 %822, %v664
          %v824 = vpop.permute.xlu0 %823
          %v826 = vmul.f32 %v789, %v778
          %v827 = vmul.f32 %v794, %v779
          %v828 = vmul.f32 %v799, %v780
          %v829 = vmul.f32 %v804, %v781
          %v830 = vmul.f32 %v809, %v782
          %v831 = vmul.f32 %v814, %v783
          %v832 = vmul.f32 %v819, %v784
          %v833 = vmul.f32 %v824, %v785
          %v834 = vpack.c.bf16 %v716, %v714
          %v835 = vpack.c.bf16 %v720, %v718
          %v836 = vpack.c.bf16 %v724, %v722
          %v837 = vpack.c.bf16 %v728, %v726
          %838 = vmatpush.bf16.msra.mxu0 %v540
          %839 = vmatpush.bf16.msra.mxu0 %v539
          %840 = vmatpush.bf16.msra.mxu0 %v538
          %841 = vmatpush.bf16.msra.mxu0 %v537
          %842 = vmatpush.bf16.msra.mxu0 %v536
          %843 = vmatpush.bf16.msra.mxu0 %v535
          %844 = vmatpush.bf16.msra.mxu0 %v534
          %845 = vmatpush.bf16.msra.mxu0 %v533
          %846 = vmatmul.bf16.gmra.mxu0 %v834
          %v847 = vpop.f32.mrf.mxu0
          %v848 = vadd.f32 0.0, %v847
          %v849 = vpop.f32.mrf.mxu0
          %v850 = vadd.f32 0.0, %v849
          %851 = vmatmul.bf16.gmra.mxu0 %v835
          %v852 = vpop.f32.mrf.mxu0
          %v853 = vadd.f32 0.0, %v852
          %v854 = vpop.f32.mrf.mxu0
          %v855 = vadd.f32 0.0, %v854
          %856 = vmatmul.bf16.gmra.mxu0 %v836
          %v857 = vpop.f32.mrf.mxu0
          %v858 = vadd.f32 0.0, %v857
          %v859 = vpop.f32.mrf.mxu0
          %v860 = vadd.f32 0.0, %v859
          %861 = vmatmul.bf16.gmra.mxu0 %v837
          %v862 = vpop.f32.mrf.mxu0
          %v863 = vadd.f32 0.0, %v862
          %v864 = vpop.f32.mrf.mxu0
          %v865 = vadd.f32 0.0, %v864
          %866 = vdwg.mxu0
          %v867 = vadd.f32 %v826, %v848
          %v868 = vadd.f32 %v827, %v850
          %v869 = vadd.f32 %v828, %v853
          %v870 = vadd.f32 %v829, %v855
          %v871 = vadd.f32 %v830, %v858
          %v872 = vadd.f32 %v831, %v860
          %v873 = vadd.f32 %v832, %v863
          %v874 = vadd.f32 %v833, %v865
          %875 = vst [vmem:[#allocation4] sm:$0xff] %v867
          %876 = vst [vmem:[#allocation4 + $0x8] sm:$0xff] %v868
          %877 = vst [vmem:[#allocation4 + $0x10] sm:$0xff] %v869
          %878 = vst [vmem:[#allocation4 + $0x18] sm:$0xff] %v870
          %879 = vst [vmem:[#allocation4 + $0x20] sm:$0xff] %v871
          %880 = vst [vmem:[#allocation4 + $0x28] sm:$0xff] %v872
          %881 = vst [vmem:[#allocation4 + $0x30] sm:$0xff] %v873
          %882 = vst [vmem:[#allocation4 + $0x38] sm:$0xff] %v874
          %883 = vst.msk [vmem:[#allocation2] sm:$0xff] %vm769, %v633
          %884 = vst.msk [vmem:[#allocation2 + $0x8] sm:$0xff] %vm769, %v634
          %885 = vst.msk [vmem:[#allocation2 + $0x10] sm:$0xff] %vm769, %v635
          %886 = vst.msk [vmem:[#allocation2 + $0x18] sm:$0xff] %vm769, %v636
          %887 = vst.msk [vmem:[#allocation2 + $0x20] sm:$0xff] %vm769, %v637
          %888 = vst.msk [vmem:[#allocation2 + $0x28] sm:$0xff] %vm769, %v638
          %889 = vst.msk [vmem:[#allocation2 + $0x30] sm:$0xff] %vm769, %v639
          %890 = vst.msk [vmem:[#allocation2 + $0x38] sm:$0xff] %vm769, %v640
        $region64: #{tpu_custom_call.1} parent=39 // pred_fallthru
          _
        // Predicated region
        $region65: #{tpu_custom_call.1} parent=39 // pred_check
          %p891 = pneg %p322
        $region66: #{tpu_custom_call.1} parent=39 // pred_check_branch
          %893 = sbr.rel (%p891) target = $region68
        $region67: #{tpu_custom_call.1} parent=39 // pred_region
          %v894 = vld [vmem:[#allocation3] sm:$0xff]
          %v895 = vld [vmem:[#allocation3 + $0x8] sm:$0xff]
          %v896 = vld [vmem:[#allocation3 + $0x10] sm:$0xff]
          %v897 = vld [vmem:[#allocation3 + $0x18] sm:$0xff]
          %v898 = vld [vmem:[#allocation3 + $0x20] sm:$0xff]
          %v899 = vld [vmem:[#allocation3 + $0x28] sm:$0xff]
          %v900 = vld [vmem:[#allocation3 + $0x30] sm:$0xff]
          %v901 = vld [vmem:[#allocation3 + $0x38] sm:$0xff]
          %vm902 = vcmp.gt.f32.partialorder %v894, 0.0
          %vm903 = vcmp.gt.f32.partialorder %v895, 0.0
          %vm904 = vcmp.gt.f32.partialorder %v896, 0.0
          %vm905 = vcmp.gt.f32.partialorder %v897, 0.0
          %vm906 = vcmp.gt.f32.partialorder %v898, 0.0
          %vm907 = vcmp.gt.f32.partialorder %v899, 0.0
          %vm908 = vcmp.gt.f32.partialorder %v900, 0.0
          %vm909 = vcmp.gt.f32.partialorder %v901, 0.0
          %v910 = vsel %vm902, %v894, 1.0
          %v911 = vsel %vm903, %v895, 1.0
          %v912 = vsel %vm904, %v896, 1.0
          %v913 = vsel %vm905, %v897, 1.0
          %v914 = vsel %vm906, %v898, 1.0
          %v915 = vsel %vm907, %v899, 1.0
          %v916 = vsel %vm908, %v900, 1.0
          %v917 = vsel %vm909, %v901, 1.0
          %v918 = vrcp.pop %v910
          %v919 = vrcp.pop %v911
          %v920 = vrcp.pop %v912
          %v921 = vrcp.pop %v913
          %v922 = vrcp.pop %v914
          %v923 = vrcp.pop %v915
          %v924 = vrcp.pop %v916
          %v925 = vrcp.pop %v917
          %v926 = vld [vmem:[#allocation4] sm:$0xff]
          %v927 = vld [vmem:[#allocation4 + $0x8] sm:$0xff]
          %v928 = vld [vmem:[#allocation4 + $0x10] sm:$0xff]
          %v929 = vld [vmem:[#allocation4 + $0x18] sm:$0xff]
          %v930 = vld [vmem:[#allocation4 + $0x20] sm:$0xff]
          %v931 = vld [vmem:[#allocation4 + $0x28] sm:$0xff]
          %v932 = vld [vmem:[#allocation4 + $0x30] sm:$0xff]
          %v933 = vld [vmem:[#allocation4 + $0x38] sm:$0xff]
          %935 = vset.pattern.permute.xlu0 0
          %936 = vperm.xlu0 %935, %v918
          %v937 = vpop.permute.xlu0 %936
          %940 = vset.pattern.permute.xlu0 0
          %941 = vperm.xlu0 %940, %v919
          %v942 = vpop.permute.xlu0 %941
          %945 = vset.pattern.permute.xlu0 0
          %946 = vperm.xlu0 %945, %v920
          %v947 = vpop.permute.xlu0 %946
          %950 = vset.pattern.permute.xlu0 0
          %951 = vperm.xlu0 %950, %v921
          %v952 = vpop.permute.xlu0 %951
          %955 = vset.pattern.permute.xlu0 0
          %956 = vperm.xlu0 %955, %v922
          %v957 = vpop.permute.xlu0 %956
          %960 = vset.pattern.permute.xlu0 0
          %961 = vperm.xlu0 %960, %v923
          %v962 = vpop.permute.xlu0 %961
          %965 = vset.pattern.permute.xlu0 0
          %966 = vperm.xlu0 %965, %v924
          %v967 = vpop.permute.xlu0 %966
          %970 = vset.pattern.permute.xlu0 0
          %971 = vperm.xlu0 %970, %v925
          %v972 = vpop.permute.xlu0 %971
          %v974 = vmul.f32 %v926, %v937
          %v975 = vmul.f32 %v927, %v942
          %v976 = vmul.f32 %v928, %v947
          %v977 = vmul.f32 %v929, %v952
          %v978 = vmul.f32 %v930, %v957
          %v979 = vmul.f32 %v931, %v962
          %v980 = vmul.f32 %v932, %v967
          %v981 = vmul.f32 %v933, %v972
          %v982 = vlaneseq
          %v983 = vand.u32 %v982, 127
          %vm984 = vcmp.ge.s32.totalorder %v983, 0
          %vm985 = vcmp.ge.s32.totalorder %v983, 8
          %vm986 = vcmp.ge.s32.totalorder %v983, 16
          %vm987 = vcmp.ge.s32.totalorder %v983, 24
          %vm988 = vcmp.ge.s32.totalorder %v983, 32
          %vm989 = vcmp.ge.s32.totalorder %v983, 40
          %vm990 = vcmp.ge.s32.totalorder %v983, 48
          %vm991 = vcmp.ge.s32.totalorder %v983, 56
          %vm992 = vcmp.lt.s32.totalorder %v983, 8
          %vm993 = vcmp.lt.s32.totalorder %v983, 16
          %vm994 = vcmp.lt.s32.totalorder %v983, 24
          %vm995 = vcmp.lt.s32.totalorder %v983, 32
          %vm996 = vcmp.lt.s32.totalorder %v983, 40
          %vm997 = vcmp.lt.s32.totalorder %v983, 48
          %vm998 = vcmp.lt.s32.totalorder %v983, 56
          %vm999 = vcmp.lt.s32.totalorder %v983, 64
          %vm1000 = vmand %vm984, %vm992
          %vm1001 = vmand %vm985, %vm993
          %vm1002 = vmand %vm986, %vm994
          %vm1003 = vmand %vm987, %vm995
          %vm1004 = vmand %vm988, %vm996
          %vm1005 = vmand %vm989, %vm997
          %vm1006 = vmand %vm990, %vm998
          %vm1007 = vmand %vm991, %vm999
          %v1008 = vsel %vm1000, %v974, 0.0
          %v1009 = vsel %vm1001, %v975, 0.0
          %v1010 = vsel %vm1002, %v976, 0.0
          %v1011 = vsel %vm1003, %v977, 0.0
          %v1012 = vsel %vm1004, %v978, 0.0
          %v1013 = vsel %vm1005, %v979, 0.0
          %v1014 = vsel %vm1006, %v980, 0.0
          %v1015 = vsel %vm1007, %v981, 0.0
          %v1016 = vadd.f32 %v1008, %v1009
          %v1017 = vadd.f32 %v1016, %v1010
          %v1018 = vadd.f32 %v1017, %v1011
          %v1019 = vadd.f32 %v1018, %v1012
          %v1020 = vadd.f32 %v1019, %v1013
          %v1021 = vadd.f32 %v1020, %v1014
          %v1022 = vadd.f32 %v1021, %v1015
          %v1023 = vpack.c.bf16 %v1022, %v1022
          %v1024 = vld [vmem:[#allocation13] sm:$0xf]
          %v1025 = vld [vmem:[#allocation13 + $0x4] sm:$0xf]
          %v1026 = vld [vmem:[#allocation13 + $0x8] sm:$0xf]
          %v1027 = vld [vmem:[#allocation13 + $0xc] sm:$0xf]
          %v1028 = vld [vmem:[#allocation13 + $0x10] sm:$0xf]
          %v1029 = vld [vmem:[#allocation13 + $0x14] sm:$0xf]
          %v1030 = vld [vmem:[#allocation13 + $0x18] sm:$0xf]
          %v1031 = vld [vmem:[#allocation13 + $0x1c] sm:$0xf]
          %v1032 = vld [vmem:[#allocation13 + $0x20] sm:$0xf]
          %v1033 = vld [vmem:[#allocation13 + $0x24] sm:$0xf]
          %v1034 = vld [vmem:[#allocation13 + $0x28] sm:$0xf]
          %v1035 = vld [vmem:[#allocation13 + $0x2c] sm:$0xf]
          %v1036 = vld [vmem:[#allocation13 + $0x30] sm:$0xf]
          %v1037 = vld [vmem:[#allocation13 + $0x34] sm:$0xf]
          %v1038 = vld [vmem:[#allocation13 + $0x38] sm:$0xf]
          %v1039 = vld [vmem:[#allocation13 + $0x3c] sm:$0xf]
          %v1040 = vld [vmem:[%s5] sm:$0x1]
          %v1042 = vperm.slane %v1040, 0
          %v1060 = vunpack.c.l.b16 %v1024
          %v1061 = vunpack.c.l.b16 %v1025
          %v1062 = vunpack.c.l.b16 %v1026
          %v1063 = vunpack.c.l.b16 %v1027
          %v1064 = vunpack.c.l.b16 %v1028
          %v1065 = vunpack.c.l.b16 %v1029
          %v1066 = vunpack.c.l.b16 %v1030
          %v1067 = vunpack.c.l.b16 %v1031
          %v1068 = vunpack.c.l.b16 %v1032
          %v1069 = vunpack.c.l.b16 %v1033
          %v1070 = vunpack.c.l.b16 %v1034
          %v1071 = vunpack.c.l.b16 %v1035
          %v1072 = vunpack.c.l.b16 %v1036
          %v1073 = vunpack.c.l.b16 %v1037
          %v1074 = vunpack.c.l.b16 %v1038
          %v1075 = vunpack.c.l.b16 %v1039
          %v1076 = vpack.c.b16 %v1061, %v1060
          %v1077 = vpack.c.b16 %v1063, %v1062
          %v1078 = vpack.c.b16 %v1065, %v1064
          %v1079 = vpack.c.b16 %v1067, %v1066
          %v1080 = vpack.c.b16 %v1069, %v1068
          %v1081 = vpack.c.b16 %v1071, %v1070
          %v1082 = vpack.c.b16 %v1073, %v1072
          %v1083 = vpack.c.b16 %v1075, %v1074
          %1092 = vmatpush.bf16.msra.mxu0 %v1083
          %1093 = vmatpush.bf16.msra.mxu0 %v1082
          %1094 = vmatpush.bf16.msra.mxu0 %v1081
          %1095 = vmatpush.bf16.msra.mxu0 %v1080
          %1096 = vmatpush.bf16.msra.mxu0 %v1079
          %1097 = vmatpush.bf16.msra.mxu0 %v1078
          %1098 = vmatpush.bf16.msra.mxu0 %v1077
          %1099 = vmatpush.bf16.msra.mxu0 %v1076
          %1100 = vmatmul.bf16.gmra.mxu0 %v1023
          %v1101 = vpop.f32.mrf.mxu0
          %v1102 = vadd.f32 %v1042, %v1101
          %v1103 = vpop.f32.mrf.mxu0
          %1104 = vdwg.mxu0
          %1105 = vst [vmem:[%s319] sm:$0xff] %v1102
        $region68: #{tpu_custom_call.1} parent=39 // pred_fallthru
          _
        %s1106 = sand.u32 %s165, 1
        %s1107 = scalar_lea.sflag [#allocation9], %s1106
        %s1108 = sand.u32 %s165, 1
        %s1109 = smul.addr %s1108, 8
        %s1110 = scalar_lea.vmem [#allocation15], %s1109
        // Predicated region
        $region69: #{tpu_custom_call.1} parent=39 // pred_check
          %p1111 = pneg %p175
        $region70: #{tpu_custom_call.1} parent=39 // pred_check_branch
          %1113 = sbr.rel (%p1111) target = $region72
        $region71: #{tpu_custom_call.1} parent=39 // pred_region
          %1115 = vsyncadd %s1107, 0
          %s1116 = smul.addr %s37, 8
          %s1117 = scalar_lea.hbm %s6, %s1116
          %s1119 = sshll.u32 %s1110, 4
          %s1120 = int_to_ptr.vmem [resolvable:$true] %s1119
          %s1121 = sshll.u32 %s1117, 4
          %s1122 = int_to_ptr.hbm [resolvable:$true] %s1121
          %1124 = dma.vmem_to_hbm [thread:$0]  %s1120, 128, %s1122, %s1107
        $region72: #{tpu_custom_call.1} parent=39 // pred_fallthru
          _
      $region40: #{tpu_custom_call.1} parent=5 // pred_fallthru
        _
      %p1125 = scmp.le.s32.totalorder 2, %s28
      // Predicated region
      $region73: #{tpu_custom_call.1} parent=5 // pred_check
        %p1126 = pneg %p1125
      $region74: #{tpu_custom_call.1} parent=5 // pred_check_branch
        %1128 = sbr.rel (%p1126) target = $region76
      $region75: #{tpu_custom_call.1} parent=5 // pred_region
        %s1129 = ssub.s32 %s28, 2
        // Predicated region
        $region77: #{tpu_custom_call.1} parent=75 // pred_check
          %p1130 = pneg %p181
        $region78: #{tpu_custom_call.1} parent=75 // pred_check_branch
          %1132 = sbr.rel (%p1130) target = $region80
        $region79: #{tpu_custom_call.1} parent=75 // pred_region
          %s1133 = sand.u32 %s166, 1
          %s1134 = scalar_lea.sflag [#allocation9], %s1133
          %s1135 = sand.u32 %s166, 1
          %s1136 = smul.addr %s1135, 8
          %s1137 = scalar_lea.vmem [#allocation15], %s1136
          %1139 = dma.done %s1134, 128
        $region80: #{tpu_custom_call.1} parent=75 // pred_fallthru
          _
      $region76: #{tpu_custom_call.1} parent=5 // pred_fallthru
        _
    $region6: #{tpu_custom_call.1} parent=1 // loop_footer
      %s32 = sadd.s32 1, %s28
    $region7: #{tpu_custom_call.1} parent=1 // loop_footer_branch
      %27 = sbr.rel target = $region3
    $region8: #{tpu_custom_call.1} parent=1 // loop_exit
      _
    %1140 = vsyncpa [#allocation8], 1
    %s1141 = scalar_lea.sflag [#allocation8], 1
    %1142 = vsyncpa %s1141, 1
    %1143 = vsyncpa [#allocation11], 1
    %s1144 = scalar_lea.sflag [#allocation11], 1
    %1145 = vsyncpa %s1144, 1
    %1146 = vsyncpa [#allocation14], 1
    %1147 = vsyncpa [#allocation9], 1
    %s1148 = scalar_lea.sflag [#allocation9], 1
    %1149 = vsyncpa %s1148, 1

</llo_original>
